<compile_context>
chip_gen: v7x
topology: tpu7x:2x2x1
jax: 0.10.0
libtpu: 0.0.40
codegen_flags: <defaults>
</compile_context>

<pallas_src>
import math

import jax
import jax.numpy as jnp
import numpy as np
from jax.experimental import pallas as pl
from jax.experimental.pallas import tpu as pltpu

_LANE = 128
_VMEM_LIMIT = 64 * 1024 * 1024  # explicit cap; actual usage budgeted to ~20 MiB


def _round_up(x, m):
    return (x + m - 1) // m * m


# ---------------------------------------------------------------------------
# Kernel 1: decoder = 1x1 conv -> ReLU -> Dropout(eval) -> 1x1 conv -> ReLU
# (a 1x1 conv is a per-pixel matmul over channels)
# ---------------------------------------------------------------------------
def _decoder_kernel(x_ref, w1_ref, b1_ref, w2_ref, b2_ref, o_ref):
    h = jnp.dot(x_ref[...], w1_ref[...], preferred_element_type=jnp.float32)
    h = jnp.maximum(h + b1_ref[...], 0.0)
    # Dropout(p=0.8) is identity in eval mode (inference semantics).
    y = jnp.dot(h, w2_ref[...], preferred_element_type=jnp.float32)
    o_ref[...] = jnp.maximum(y + b2_ref[...], 0.0)


def _row_tile(n_rows, cap):
    """Large row tile: multiple of 8, capped for VMEM, keep >=2 grid steps
    when there is enough work (dual-TC chips)."""
    tm = min(cap, _round_up(n_rows, 8))
    if _round_up(n_rows, tm) // tm < 2 and tm > 8:
        tm = max(8, _round_up(tm // 2, 8))
    return tm, _round_up(n_rows, tm)


def decoder_matmul(x, w1, b1, w2, b2):
    n, c = x.shape
    tm, n_pad = _row_tile(n, 1024)
    if n_pad != n:
        x = jnp.pad(x, ((0, n_pad - n), (0, 0)))
    # NOTE: w1/b1/w2/b2 have constant index_maps; pipeline_mode=pl.Buffered(1)
    # would save ~2 MiB of duplicate VMEM but is left at the default double
    # buffering for maximum lowering compatibility (weights are small).
    out = pl.pallas_call(
        _decoder_kernel,
        out_shape=jax.ShapeDtypeStruct((n_pad, c), jnp.float32),
        grid_spec=pltpu.PrefetchScalarGridSpec(
            num_scalar_prefetch=0,
            grid=(n_pad // tm,),
            in_specs=[
                pl.BlockSpec((tm, c), lambda i: (i, 0)),
                pl.BlockSpec((c, c), lambda i: (0, 0)),
                pl.BlockSpec((1, c), lambda i: (0, 0)),
                pl.BlockSpec((c, c), lambda i: (0, 0)),
                pl.BlockSpec((1, c), lambda i: (0, 0)),
            ],
            out_specs=pl.BlockSpec((tm, c), lambda i: (i, 0)),
        ),
        compiler_params=pltpu.CompilerParams(
            dimension_semantics=("parallel",),
            vmem_limit_bytes=_VMEM_LIMIT,
        ),
    )(x, w1, b1, w2, b2)
    return out[:n] if n_pad != n else out


# ---------------------------------------------------------------------------
# Kernel 2: hoisted + source-split ConvTranspose2d(1280, nc, k=2, s=2).
# One pipelined pass over (decoder output, pool_4, pool_3); each grid step
# covers T decoder rows, i.e. T*W decoder pixels, 4*T*W pool_4 pixels and
# 16*T*W pool_3 pixels (all contiguous -> index maps are simply (i, 0)).
# ---------------------------------------------------------------------------
def _tconv_split_kernel(y_ref, p4_ref, p3_ref, w1_ref, w2_ref, w3_ref,
                        oy_ref, o4_ref, o3_ref):
    oy_ref[...] = jnp.dot(y_ref[...], w1_ref[...], preferred_element_type=jnp.float32)
    o4_ref[...] = jnp.dot(p4_ref[...], w2_ref[...], preferred_element_type=jnp.float32)
    o3_ref[...] = jnp.dot(p3_ref[...], w3_ref[...], preferred_element_type=jnp.float32)


def _pick_rows_per_step(d_rows, w, max_pixels=256):
    """Decoder rows per grid step: (T*w) % 8 == 0 so every block's sublane dim
    is aligned; largest block (pool_3 / its output) stays ~4k rows so the
    double-buffered working set is ~20 MiB (fits v7x's 64 MiB VMEM with
    headroom); keep >=2 grid steps when there is enough work."""
    t0 = 8 // math.gcd(w, 8)
    t = max(t0, (max(max_pixels // w, 1) // t0) * t0)
    t = min(t, _round_up(d_rows, t0))
    while t > t0 and _round_up(d_rows, t) // t < 2:
        t -= t0
    return t, _round_up(d_rows, t)


def fused_tconv(yf, p4f, p3f, wt, num_classes, d_rows, w_pix):
    """Per-pixel ConvTranspose contributions from each concat source at its
    native resolution; outputs lane-padded to 128 columns (col = co*4+ki*2+kj)."""
    ncq = num_classes * 4
    assert ncq <= _LANE, "num_classes * 4 must fit within one 128-lane group"
    cin = wt.shape[0]
    assert cin == 1280
    wt_flat = wt.reshape(cin, ncq)                 # col = co*4 + ki*2 + kj
    pad_c = _LANE - ncq
    w1 = jnp.pad(wt_flat[:512], ((0, 0), (0, pad_c)))       # decoder-output rows
    w2 = jnp.pad(wt_flat[512:1024], ((0, 0), (0, pad_c)))   # pool_4 rows
    w3 = jnp.pad(wt_flat[1024:], ((0, 0), (0, pad_c)))      # pool_3 rows

    t_rows, d_pad = _pick_rows_per_step(d_rows, w_pix)
    if d_pad != d_rows:
        extra = d_pad - d_rows
        yf = jnp.pad(yf, ((0, extra * w_pix), (0, 0)))
        p4f = jnp.pad(p4f, ((0, extra * 4 * w_pix), (0, 0)))
        p3f = jnp.pad(p3f, ((0, extra * 16 * w_pix), (0, 0)))

    ty = t_rows * w_pix                            # decoder pixels per step
    g = d_pad // t_rows

    oy, o4, o3 = pl.pallas_call(
        _tconv_split_kernel,
        out_shape=(
            jax.ShapeDtypeStruct((d_pad * w_pix, _LANE), jnp.float32),
            jax.ShapeDtypeStruct((d_pad * 4 * w_pix, _LANE), jnp.float32),
            jax.ShapeDtypeStruct((d_pad * 16 * w_pix, _LANE), jnp.float32),
        ),
        grid_spec=pltpu.PrefetchScalarGridSpec(
            num_scalar_prefetch=0,
            grid=(g,),
            in_specs=[
                pl.BlockSpec((ty, 512), lambda i: (i, 0)),
                pl.BlockSpec((4 * ty, 512), lambda i: (i, 0)),
                pl.BlockSpec((16 * ty, 256), lambda i: (i, 0)),
                pl.BlockSpec((512, _LANE), lambda i: (0, 0)),
                pl.BlockSpec((512, _LANE), lambda i: (0, 0)),
                pl.BlockSpec((256, _LANE), lambda i: (0, 0)),
            ],
            out_specs=(
                pl.BlockSpec((ty, _LANE), lambda i: (i, 0)),
                pl.BlockSpec((4 * ty, _LANE), lambda i: (i, 0)),
                pl.BlockSpec((16 * ty, _LANE), lambda i: (i, 0)),
            ),
        ),
        compiler_params=pltpu.CompilerParams(
            dimension_semantics=("parallel",),
            vmem_limit_bytes=_VMEM_LIMIT,
        ),
    )(yf, p4f, p3f, w1, w2, w3)

    # drop row padding and lane padding
    oy = oy[: d_rows * w_pix, :ncq]
    o4 = o4[: d_rows * 4 * w_pix, :ncq]
    o3 = o3[: d_rows * 16 * w_pix, :ncq]
    return oy, o4, o3


# ---------------------------------------------------------------------------
# Forward pass
# ---------------------------------------------------------------------------
def column_decoder_forward(x, pool_3, pool_4, params, num_classes):
    B, C, H, W = x.shape
    assert C == 512
    assert pool_4.shape == (B, 512, 2 * H, 2 * W)
    assert pool_3.shape == (B, 256, 4 * H, 4 * W)
    nc = num_classes

    # NCHW -> NHWC -> (pixels, channels); each tensor transposed exactly once.
    xf = jnp.transpose(x, (0, 2, 3, 1)).reshape(B * H * W, 512)
    p4f = jnp.transpose(pool_4, (0, 2, 3, 1)).reshape(B * 4 * H * W, 512)
    p3f = jnp.transpose(pool_3, (0, 2, 3, 1)).reshape(B * 16 * H * W, 256)

    # decoder stage (Pallas)
    yf = decoder_matmul(xf, params["w1"], params["b1"], params["w2"], params["b2"])

    # hoisted + source-split ConvTranspose2d (Pallas, one fused pass)
    oy, o4p, o3p = fused_tconv(yf, p4f, p3f, params["wt"], nc,
                               d_rows=B * H, w_pix=W)

    A = oy.reshape(B, H, W, nc, 2, 2)
    P4 = o4p.reshape(B, 2 * H, 2 * W, nc, 2, 2)
    P3 = o3p.reshape(B, 4 * H, 4 * W, nc, 2, 2)

    # Nearest-upsample the tiny per-source contributions to (4H, 4W) and add.
    # TODO(synk): nearest replication / layout assembly is pure data movement,
    # kept as single reshape+broadcast XLA ops rather than a Pallas kernel.
    A_up = jnp.broadcast_to(A[:, :, None, :, None], (B, H, 4, W, 4, nc, 2, 2))
    A_up = A_up.reshape(B, 4 * H, 4 * W, nc, 2, 2)
    P4_up = jnp.broadcast_to(P4[:, :, None, :, None],
                             (B, 2 * H, 2, 2 * W, 2, nc, 2, 2))
    P4_up = P4_up.reshape(B, 4 * H, 4 * W, nc, 2, 2)
    o4x = A_up + P4_up + P3 + params["bt"].reshape(1, 1, 1, nc, 1, 1)

    # Final output: pixel (8*i4 + 2*di + ki, 8*j4 + 2*dj + kj) of the 32H x 32W
    # map equals o4x[b, i4, j4, :, ki, kj] for di, dj in [0, 4).
    o = jnp.transpose(o4x, (0, 3, 1, 4, 2, 5))       # (B, nc, 4H, ki, 4W, kj)
    o = o[:, :, :, None, :, :, None, :]              # insert di, dj
    o = jnp.broadcast_to(o, (B, nc, 4 * H, 4, 2, 4 * W, 4, 2))
    return o.reshape(B, nc, 32 * H, 32 * W)


# ---------------------------------------------------------------------------
# Pure-jnp reference (follows the PyTorch op order literally)
# ---------------------------------------------------------------------------
def _nearest_up2_nhwc(x):
    x = jnp.repeat(x, 2, axis=1)
    return jnp.repeat(x, 2, axis=2)


def _reference_forward(x, pool_3, pool_4, params, num_classes):
    B, C, H, W = x.shape
    xf = jnp.transpose(x, (0, 2, 3, 1)).reshape(B * H * W, C)
    h = jnp.maximum(xf @ params["w1"] + params["b1"], 0.0)
    y = jnp.maximum(h @ params["w2"] + params["b2"], 0.0)
    y = y.reshape(B, H, W, 512)
    y = _nearest_up2_nhwc(y)
    y = jnp.concatenate([y, jnp.transpose(pool_4, (0, 2, 3, 1))], axis=-1)
    y = _nearest_up2_nhwc(y)
    y = jnp.concatenate([y, jnp.transpose(pool_3, (0, 2, 3, 1))], axis=-1)
    y = _nearest_up2_nhwc(y)
    y = _nearest_up2_nhwc(y)
    Bh, Hh, Wh, Cin = y.shape
    yf = y.reshape(Bh * Hh * Wh, Cin)
    w_t = params["wt"].reshape(Cin, num_classes * 4)
    b_t = jnp.repeat(params["bt"], 4).reshape(1, num_classes * 4)
    o = yf @ w_t + b_t
    o = o.reshape(Bh, Hh, Wh, num_classes, 2, 2)
    o = jnp.transpose(o, (0, 3, 1, 4, 2, 5)).reshape(Bh, num_classes, 2 * Hh, 2 * Wh)
    return o


# ---------------------------------------------------------------------------
if __name__ == "__main__":
    num_classes = 2
    B, h, w = 2, 2, 2          # small spatial dims; channel sizes fixed by module

    key = jax.random.PRNGKey(0)
    kx, kp3, kp4, k1, k2, k3, k4, k5, k6 = jax.random.split(key, 9)

    x = jax.random.normal(kx, (B, 512, h, w), dtype=jnp.float32)
    pool_4 = jax.random.normal(kp4, (B, 512, 2 * h, 2 * w), dtype=jnp.float32)
    pool_3 = jax.random.normal(kp3, (B, 256, 4 * h, 4 * w), dtype=jnp.float32)

    params = {
        # 1x1 conv weights stored as (Cin, Cout) matmul matrices
        "w1": 0.02 * jax.random.normal(k1, (512, 512), dtype=jnp.float32),
        "b1": 0.01 * jax.random.normal(k2, (1, 512), dtype=jnp.float32),
        "w2": 0.02 * jax.random.normal(k3, (512, 512), dtype=jnp.float32),
        "b2": 0.01 * jax.random.normal(k4, (1, 512), dtype=jnp.float32),
        # ConvTranspose2d weight in PyTorch layout (Cin, Cout, kH, kW)
        "wt": 0.02 * jax.random.normal(k5, (1280, num_classes, 2, 2), dtype=jnp.float32),
        "bt": 0.01 * jax.random.normal(k6, (num_classes,), dtype=jnp.float32),
    }

    fwd = jax.jit(lambda a, p3, p4: column_decoder_forward(a, p3, p4, params, num_classes))
    out = fwd(x, pool_3, pool_4)
    out = jax.block_until_ready(out)

    assert out.shape == (B, num_classes, 32 * h, 32 * w), out.shape

    ref = _reference_forward(x, pool_3, pool_4, params, num_classes)
    np.testing.assert_allclose(np.asarray(out), np.asarray(ref), rtol=1e-4, atol=1e-4)

    print("KERNEL_OK")
</pallas_src>

<mosaic_0001>
module attributes {stable_mosaic.version = 11 : i64} {
  func.func @_tconv_split_kernel(%arg0: i32, %arg1: memref<8x512xf32, #tpu.memory_space<vmem>>, %arg2: memref<32x512xf32, #tpu.memory_space<vmem>>, %arg3: memref<128x256xf32, #tpu.memory_space<vmem>>, %arg4: memref<512x128xf32, #tpu.memory_space<vmem>>, %arg5: memref<512x128xf32, #tpu.memory_space<vmem>>, %arg6: memref<256x128xf32, #tpu.memory_space<vmem>>, %arg7: memref<8x128xf32, #tpu.memory_space<vmem>>, %arg8: memref<32x128xf32, #tpu.memory_space<vmem>>, %arg9: memref<128x128xf32, #tpu.memory_space<vmem>>) attributes {dimension_semantics = [#tpu.dimension_semantics<parallel>], iteration_bounds = array<i64: 1>, scalar_prefetch = 0 : i64, scratch_operands = 0 : i64, tpu.core_type = #tpu.core_type<tc>, window_params = [{transform_indices = @transform_0, window_bounds = array<i64: 8, 512>}, {transform_indices = @transform_1, window_bounds = array<i64: 32, 512>}, {transform_indices = @transform_2, window_bounds = array<i64: 128, 256>}, {pipeline_mode = #tpu.pipeline_mode<synchronous>, transform_indices = @transform_3, window_bounds = array<i64: 512, 128>}, {pipeline_mode = #tpu.pipeline_mode<synchronous>, transform_indices = @transform_4, window_bounds = array<i64: 512, 128>}, {pipeline_mode = #tpu.pipeline_mode<synchronous>, transform_indices = @transform_5, window_bounds = array<i64: 256, 128>}, {transform_indices = @transform_6, window_bounds = array<i64: 8, 128>}, {transform_indices = @transform_7, window_bounds = array<i64: 32, 128>}, {transform_indices = @transform_8, window_bounds = array<i64: 128, 128>}]} {
    %c0 = arith.constant 0 : index
    %c0_0 = arith.constant 0 : index
    %0 = vector.load %arg1[%c0, %c0_0] : memref<8x512xf32, #tpu.memory_space<vmem>>, vector<8x512xf32>
    %c0_1 = arith.constant 0 : index
    %c0_2 = arith.constant 0 : index
    %1 = vector.load %arg4[%c0_1, %c0_2] : memref<512x128xf32, #tpu.memory_space<vmem>>, vector<512x128xf32>
    %cst = arith.constant dense<0.000000e+00> : vector<8x128xf32>
    %2 = tpu.matmul %0, %1, %cst {dimension_numbers = #tpu.dot_dimension_numbers<[1], [0], [0], [1], [0, 0, 1, 1], [], []>} : vector<8x512xf32>, vector<512x128xf32>, vector<8x128xf32> -> vector<8x128xf32>
    %c0_3 = arith.constant 0 : index
    %c0_4 = arith.constant 0 : index
    %3 = vector.load %arg7[%c0_3, %c0_4] : memref<8x128xf32, #tpu.memory_space<vmem>>, vector<8x128xf32>
    tpu.vector_store %arg7[%c0_3, %c0_4], %2 {strides = array<i32>} : memref<8x128xf32, #tpu.memory_space<vmem>>, vector<8x128xf32>,
    %c0_5 = arith.constant 0 : index
    %c0_6 = arith.constant 0 : index
    %4 = vector.load %arg2[%c0_5, %c0_6] : memref<32x512xf32, #tpu.memory_space<vmem>>, vector<32x512xf32>
    %c0_7 = arith.constant 0 : index
    %c0_8 = arith.constant 0 : index
    %5 = vector.load %arg5[%c0_7, %c0_8] : memref<512x128xf32, #tpu.memory_space<vmem>>, vector<512x128xf32>
    %cst_9 = arith.constant dense<0.000000e+00> : vector<32x128xf32>
    %6 = tpu.matmul %4, %5, %cst_9 {dimension_numbers = #tpu.dot_dimension_numbers<[1], [0], [0], [1], [0, 0, 1, 1], [], []>} : vector<32x512xf32>, vector<512x128xf32>, vector<32x128xf32> -> vector<32x128xf32>
    %c0_10 = arith.constant 0 : index
    %c0_11 = arith.constant 0 : index
    %7 = vector.load %arg8[%c0_10, %c0_11] : memref<32x128xf32, #tpu.memory_space<vmem>>, vector<32x128xf32>
    tpu.vector_store %arg8[%c0_10, %c0_11], %6 {strides = array<i32>} : memref<32x128xf32, #tpu.memory_space<vmem>>, vector<32x128xf32>,
    %c0_12 = arith.constant 0 : index
    %c0_13 = arith.constant 0 : index
    %8 = vector.load %arg3[%c0_12, %c0_13] : memref<128x256xf32, #tpu.memory_space<vmem>>, vector<128x256xf32>
    %c0_14 = arith.constant 0 : index
    %c0_15 = arith.constant 0 : index
    %9 = vector.load %arg6[%c0_14, %c0_15] : memref<256x128xf32, #tpu.memory_space<vmem>>, vector<256x128xf32>
    %cst_16 = arith.constant dense<0.000000e+00> : vector<128x128xf32>
    %10 = tpu.matmul %8, %9, %cst_16 {dimension_numbers = #tpu.dot_dimension_numbers<[1], [0], [0], [1], [0, 0, 1, 1], [], []>} : vector<128x256xf32>, vector<256x128xf32>, vector<128x128xf32> -> vector<128x128xf32>
    %c0_17 = arith.constant 0 : index
    %c0_18 = arith.constant 0 : index
    %11 = vector.load %arg9[%c0_17, %c0_18] : memref<128x128xf32, #tpu.memory_space<vmem>>, vector<128x128xf32>
    tpu.vector_store %arg9[%c0_17, %c0_18], %10 {strides = array<i32>} : memref<128x128xf32, #tpu.memory_space<vmem>>, vector<128x128xf32>,
    return
  }
  func.func @transform_0(%arg0: i32) -> (i32, i32) {
    %c0_i32 = arith.constant 0 : i32
    %c0_i32_0 = arith.constant 0 : i32
    return %arg0, %c0_i32 : i32, i32
  }
  func.func @transform_1(%arg0: i32) -> (i32, i32) {
    %c0_i32 = arith.constant 0 : i32
    %c0_i32_0 = arith.constant 0 : i32
    return %arg0, %c0_i32 : i32, i32
  }
  func.func @transform_2(%arg0: i32) -> (i32, i32) {
    %c0_i32 = arith.constant 0 : i32
    %c0_i32_0 = arith.constant 0 : i32
    return %arg0, %c0_i32 : i32, i32
  }
  func.func @transform_3(%arg0: i32) -> (i32, i32) {
    %c0_i32 = arith.constant 0 : i32
    %c0_i32_0 = arith.constant 0 : i32
    %c0_i32_1 = arith.constant 0 : i32
    return %c0_i32, %c0_i32_0 : i32, i32
  }
  func.func @transform_4(%arg0: i32) -> (i32, i32) {
    %c0_i32 = arith.constant 0 : i32
    %c0_i32_0 = arith.constant 0 : i32
    %c0_i32_1 = arith.constant 0 : i32
    return %c0_i32, %c0_i32_0 : i32, i32
  }
  func.func @transform_5(%arg0: i32) -> (i32, i32) {
    %c0_i32 = arith.constant 0 : i32
    %c0_i32_0 = arith.constant 0 : i32
    %c0_i32_1 = arith.constant 0 : i32
    return %c0_i32, %c0_i32_0 : i32, i32
  }
  func.func @transform_6(%arg0: i32) -> (i32, i32) {
    %c0_i32 = arith.constant 0 : i32
    %c0_i32_0 = arith.constant 0 : i32
    return %arg0, %c0_i32 : i32, i32
  }
  func.func @transform_7(%arg0: i32) -> (i32, i32) {
    %c0_i32 = arith.constant 0 : i32
    %c0_i32_0 = arith.constant 0 : i32
    return %arg0, %c0_i32 : i32, i32
  }
  func.func @transform_8(%arg0: i32) -> (i32, i32) {
    %c0_i32 = arith.constant 0 : i32
    %c0_i32_0 = arith.constant 0 : i32
    return %arg0, %c0_i32 : i32, i32
  }
}

module attributes {stable_mosaic.version = 11 : i64} {
  func.func @_decoder_kernel(%arg0: i32, %arg1: memref<8x512xf32, #tpu.memory_space<vmem>>, %arg2: memref<512x512xf32, #tpu.memory_space<vmem>>, %arg3: memref<1x512xf32, #tpu.memory_space<vmem>>, %arg4: memref<512x512xf32, #tpu.memory_space<vmem>>, %arg5: memref<1x512xf32, #tpu.memory_space<vmem>>, %arg6: memref<8x512xf32, #tpu.memory_space<vmem>>) attributes {dimension_semantics = [#tpu.dimension_semantics<parallel>], iteration_bounds = array<i64: 1>, scalar_prefetch = 0 : i64, scratch_operands = 0 : i64, tpu.core_type = #tpu.core_type<tc>, window_params = [{transform_indices = @transform_0, window_bounds = array<i64: 8, 512>}, {pipeline_mode = #tpu.pipeline_mode<synchronous>, transform_indices = @transform_1, window_bounds = array<i64: 512, 512>}, {pipeline_mode = #tpu.pipeline_mode<synchronous>, transform_indices = @transform_2, window_bounds = array<i64: 1, 512>}, {pipeline_mode = #tpu.pipeline_mode<synchronous>, transform_indices = @transform_3, window_bounds = array<i64: 512, 512>}, {pipeline_mode = #tpu.pipeline_mode<synchronous>, transform_indices = @transform_4, window_bounds = array<i64: 1, 512>}, {transform_indices = @transform_5, window_bounds = array<i64: 8, 512>}]} {
    %c0 = arith.constant 0 : index
    %c0_0 = arith.constant 0 : index
    %0 = vector.load %arg1[%c0, %c0_0] : memref<8x512xf32, #tpu.memory_space<vmem>>, vector<8x512xf32>
    %c0_1 = arith.constant 0 : index
    %c0_2 = arith.constant 0 : index
    %1 = vector.load %arg2[%c0_1, %c0_2] : memref<512x512xf32, #tpu.memory_space<vmem>>, vector<512x512xf32>
    %cst = arith.constant dense<0.000000e+00> : vector<8x512xf32>
    %2 = tpu.matmul %0, %1, %cst {dimension_numbers = #tpu.dot_dimension_numbers<[1], [0], [0], [1], [0, 0, 1, 1], [], []>} : vector<8x512xf32>, vector<512x512xf32>, vector<8x512xf32> -> vector<8x512xf32>
    %c0_3 = arith.constant 0 : index
    %c0_4 = arith.constant 0 : index
    %3 = vector.load %arg3[%c0_3, %c0_4] : memref<1x512xf32, #tpu.memory_space<vmem>>, vector<1x512xf32>
    %4 = vector.broadcast %3 : vector<1x512xf32> to vector<8x512xf32>
    %5 = arith.addf %2, %4 : vector<8x512xf32>
    %cst_5 = arith.constant 0.000000e+00 : f32
    %6 = vector.broadcast %cst_5 : f32 to vector<8x512xf32>
    %7 = arith.maximumf %5, %6 : vector<8x512xf32>
    %c0_6 = arith.constant 0 : index
    %c0_7 = arith.constant 0 : index
    %8 = vector.load %arg4[%c0_6, %c0_7] : memref<512x512xf32, #tpu.memory_space<vmem>>, vector<512x512xf32>
    %cst_8 = arith.constant dense<0.000000e+00> : vector<8x512xf32>
    %9 = tpu.matmul %7, %8, %cst_8 {dimension_numbers = #tpu.dot_dimension_numbers<[1], [0], [0], [1], [0, 0, 1, 1], [], []>} : vector<8x512xf32>, vector<512x512xf32>, vector<8x512xf32> -> vector<8x512xf32>
    %c0_9 = arith.constant 0 : index
    %c0_10 = arith.constant 0 : index
    %10 = vector.load %arg5[%c0_9, %c0_10] : memref<1x512xf32, #tpu.memory_space<vmem>>, vector<1x512xf32>
    %11 = vector.broadcast %10 : vector<1x512xf32> to vector<8x512xf32>
    %12 = arith.addf %9, %11 : vector<8x512xf32>
    %cst_11 = arith.constant 0.000000e+00 : f32
    %13 = vector.broadcast %cst_11 : f32 to vector<8x512xf32>
    %14 = arith.maximumf %12, %13 : vector<8x512xf32>
    %c0_12 = arith.constant 0 : index
    %c0_13 = arith.constant 0 : index
    %15 = vector.load %arg6[%c0_12, %c0_13] : memref<8x512xf32, #tpu.memory_space<vmem>>, vector<8x512xf32>
    tpu.vector_store %arg6[%c0_12, %c0_13], %14 {strides = array<i32>} : memref<8x512xf32, #tpu.memory_space<vmem>>, vector<8x512xf32>,
    return
  }
  func.func @transform_0(%arg0: i32) -> (i32, i32) {
    %c0_i32 = arith.constant 0 : i32
    %c0_i32_0 = arith.constant 0 : i32
    return %arg0, %c0_i32 : i32, i32
  }
  func.func @transform_1(%arg0: i32) -> (i32, i32) {
    %c0_i32 = arith.constant 0 : i32
    %c0_i32_0 = arith.constant 0 : i32
    %c0_i32_1 = arith.constant 0 : i32
    return %c0_i32, %c0_i32_0 : i32, i32
  }
  func.func @transform_2(%arg0: i32) -> (i32, i32) {
    %c0_i32 = arith.constant 0 : i32
    %c0_i32_0 = arith.constant 0 : i32
    %c0_i32_1 = arith.constant 0 : i32
    return %c0_i32, %c0_i32_0 : i32, i32
  }
  func.func @transform_3(%arg0: i32) -> (i32, i32) {
    %c0_i32 = arith.constant 0 : i32
    %c0_i32_0 = arith.constant 0 : i32
    %c0_i32_1 = arith.constant 0 : i32
    return %c0_i32, %c0_i32_0 : i32, i32
  }
  func.func @transform_4(%arg0: i32) -> (i32, i32) {
    %c0_i32 = arith.constant 0 : i32
    %c0_i32_0 = arith.constant 0 : i32
    %c0_i32_1 = arith.constant 0 : i32
    return %c0_i32, %c0_i32_0 : i32, i32
  }
  func.func @transform_5(%arg0: i32) -> (i32, i32) {
    %c0_i32 = arith.constant 0 : i32
    %c0_i32_0 = arith.constant 0 : i32
    return %arg0, %c0_i32 : i32, i32
  }
}

</mosaic_0001>

<llo_original>
// kernel: _lambda_.3
$region0: #{_lambda_.3}
  #allocation0 [shape = 'u32[]', space=smem, size = 0x4, offset = 0x4, fixed_abs, tag = 'smem constant byte address 0x4 - core index']
  #allocation1 [shape = 'u32[144,128]{1,0:T(1,128)}', space=vmem, size = 0x12000, scoped, tag = 'internal scratch']
  %s0 = inlined_call_operand.hbm [shape: f32[8,512], index: 0, kind: input, shape index: {}]
  %s1 = inlined_call_operand.hbm [shape: f32[32,512], index: 1, kind: input, shape index: {}]
  %s2 = inlined_call_operand.hbm [shape: f32[128,256], index: 2, kind: input, shape index: {}]
  %s3 = inlined_call_operand.hbm [shape: f32[512,128], index: 3, kind: input, shape index: {}]
  %s4 = inlined_call_operand.hbm [shape: f32[512,128], index: 4, kind: input, shape index: {}]
  %s5 = inlined_call_operand.hbm [shape: f32[256,128], index: 5, kind: input, shape index: {}]
  %s6 = inlined_call_operand.hbm [shape: f32[8,128], index: 6, kind: output, shape index: {0}]
  %s7 = inlined_call_operand.hbm [shape: f32[32,128], index: 7, kind: output, shape index: {1}]
  %s8 = inlined_call_operand.hbm [shape: f32[128,128], index: 8, kind: output, shape index: {2}]
  %9 = xla_tuple %s6, %s7, %s8
  %s10 = sld [smem:[#allocation0]]
  $region74: #{_lambda_.3} parent=0
    _
  %s12 = ssub.s32 1, %s10
  %s13 = scalar_select 0, %s12, %s10
  $region1: #{_lambda_.3} parent=0
    #allocation2 [shape = 'u8[16384]{0}', space=vmem, size = 0x4000, scoped, tag = 'input window, operand 0, single buffered']
    #allocation3 [shape = 's32[1]{0}', space=sflag, size = 0x4, scoped, tag = 'scoped memory for _lambda_.3']
    #allocation4 [shape = 's32[1]{0}', space=sflag, size = 0x4, scoped, tag = 'scoped memory for _lambda_.3']
    #allocation5 [shape = 'u8[65536]{0}', space=vmem, size = 0x10000, scoped, tag = 'input window, operand 1, single buffered']
    #allocation6 [shape = 's32[1]{0}', space=sflag, size = 0x4, scoped, tag = 'scoped memory for _lambda_.3']
    #allocation7 [shape = 'u8[131072]{0}', space=vmem, size = 0x20000, scoped, tag = 'input window, operand 2, single buffered']
    #allocation8 [shape = 'u8[262144]{0}', space=vmem, size = 0x40000, scoped, tag = 'input window, operand 3, single buffered']
    #allocation9 [shape = 's32[1]{0}', space=sflag, size = 0x4, scoped, tag = 'scoped memory for _lambda_.3']
    #allocation10 [shape = 'u8[262144]{0}', space=vmem, size = 0x40000, scoped, tag = 'input window, operand 4, single buffered']
    #allocation11 [shape = 'u8[131072]{0}', space=vmem, size = 0x20000, scoped, tag = 'input window, operand 5, single buffered']
    #allocation12 [shape = 's32[1]{0}', space=sflag, size = 0x4, scoped, tag = 'scoped memory for _lambda_.3']
    #allocation13 [shape = 'u8[4096]{0}', space=vmem, size = 0x1000, scoped, tag = 'output window, operand 0, single buffered']
    #allocation14 [shape = 'u8[16384]{0}', space=vmem, size = 0x4000, scoped, tag = 'output window, operand 1, single buffered']
    #allocation15 [shape = 's32[1]{0}', space=sflag, size = 0x4, scoped, tag = 'scoped memory for _lambda_.3']
    #allocation16 [shape = 'u8[65536]{0}', space=vmem, size = 0x10000, scoped, tag = 'output window, operand 2, single buffered']
    %14 = vsyncpa [#allocation3], 0
    %15 = vsyncpa [#allocation6], 0
    %16 = vsyncpa [#allocation9], 0
    %17 = vsyncpa [#allocation12], 0
    %18 = vsyncpa [#allocation4], 0
    %19 = vsyncpa [#allocation15], 0
    // Predicated region
    $region2: #{_lambda_.3} parent=1 // pred_check
      _
    $region3: #{_lambda_.3} parent=1 // pred_check_branch
      %21 = sbr.rel (0) target = $region5
    $region4: #{_lambda_.3} parent=1 // pred_region
      %s23 = ssub.s32 512, 512
      %24 = vsyncadd [#allocation3], %s23
      %s26 = sshll.u32 [#allocation2], 4
      %s27 = int_to_ptr.vmem [resolvable:$true] %s26
      %29 = dma.hbm_to_vmem [thread:$0]  %s0, 512, %s27, [#allocation3]
    $region5: #{_lambda_.3} parent=1 // pred_fallthru
      _
    // Predicated region
    $region6: #{_lambda_.3} parent=1 // pred_check
      _
    $region7: #{_lambda_.3} parent=1 // pred_check_branch
      %31 = sbr.rel (0) target = $region9
    $region8: #{_lambda_.3} parent=1 // pred_region
      %s33 = ssub.s32 2048, 2048
      %34 = vsyncadd [#allocation6], %s33
      %s35 = sshll.u32 [#allocation5], 4
      %s36 = int_to_ptr.vmem [resolvable:$true] %s35
      %41 = dma.hbm_to_vmem [thread:$0]  %s1, 2048, %s36, [#allocation6], 512, 512, 32
    $region9: #{_lambda_.3} parent=1 // pred_fallthru
      _
    // Predicated region
    $region10: #{_lambda_.3} parent=1 // pred_check
      _
    $region11: #{_lambda_.3} parent=1 // pred_check_branch
      %43 = sbr.rel (0) target = $region13
    $region12: #{_lambda_.3} parent=1 // pred_region
      %s45 = ssub.s32 4096, 4096
      %46 = vsyncadd [#allocation6], %s45
      %s47 = sshll.u32 [#allocation7], 4
      %s48 = int_to_ptr.vmem [resolvable:$true] %s47
      %53 = dma.hbm_to_vmem [thread:$0]  %s2, 4096, %s48, [#allocation6], 256, 256, 16
    $region13: #{_lambda_.3} parent=1 // pred_fallthru
      _
    // Predicated region
    $region14: #{_lambda_.3} parent=1 // pred_check
      _
    $region15: #{_lambda_.3} parent=1 // pred_check_branch
      %55 = sbr.rel (0) target = $region17
    $region16: #{_lambda_.3} parent=1 // pred_region
      %s57 = ssub.s32 8192, 8192
      %58 = vsyncadd [#allocation9], %s57
      %s59 = sshll.u32 [#allocation8], 4
      %s60 = int_to_ptr.vmem [resolvable:$true] %s59
      %65 = dma.hbm_to_vmem [thread:$0]  %s3, 8192, %s60, [#allocation9], 128, 128, 8
    $region17: #{_lambda_.3} parent=1 // pred_fallthru
      _
    // Predicated region
    $region18: #{_lambda_.3} parent=1 // pred_check
      _
    $region19: #{_lambda_.3} parent=1 // pred_check_branch
      %67 = sbr.rel (0) target = $region21
    $region20: #{_lambda_.3} parent=1 // pred_region
      %s69 = ssub.s32 8192, 8192
      %70 = vsyncadd [#allocation9], %s69
      %s71 = sshll.u32 [#allocation10], 4
      %s72 = int_to_ptr.vmem [resolvable:$true] %s71
      %77 = dma.hbm_to_vmem [thread:$0]  %s4, 8192, %s72, [#allocation9], 128, 128, 8
    $region21: #{_lambda_.3} parent=1 // pred_fallthru
      _
    // Predicated region
    $region22: #{_lambda_.3} parent=1 // pred_check
      _
    $region23: #{_lambda_.3} parent=1 // pred_check_branch
      %79 = sbr.rel (0) target = $region25
    $region24: #{_lambda_.3} parent=1 // pred_region
      %s81 = ssub.s32 4096, 4096
      %82 = vsyncadd [#allocation12], %s81
      %s83 = sshll.u32 [#allocation11], 4
      %s84 = int_to_ptr.vmem [resolvable:$true] %s83
      %89 = dma.hbm_to_vmem [thread:$0]  %s5, 4096, %s84, [#allocation12], 128, 128, 8
    $region25: #{_lambda_.3} parent=1 // pred_fallthru
      _
    // Predicated region
    $region26: #{_lambda_.3} parent=1 // pred_check
      _
    $region27: #{_lambda_.3} parent=1 // pred_check_branch
      %91 = sbr.rel (0) target = $region29
    $region28: #{_lambda_.3} parent=1 // pred_region
      %92 = dma.done [#allocation3], 512
    $region29: #{_lambda_.3} parent=1 // pred_fallthru
      _
    // Predicated region
    $region30: #{_lambda_.3} parent=1 // pred_check
      _
    $region31: #{_lambda_.3} parent=1 // pred_check_branch
      %94 = sbr.rel (0) target = $region33
    $region32: #{_lambda_.3} parent=1 // pred_region
      %95 = dma.done [#allocation6], 2048
    $region33: #{_lambda_.3} parent=1 // pred_fallthru
      _
    // Predicated region
    $region34: #{_lambda_.3} parent=1 // pred_check
      _
    $region35: #{_lambda_.3} parent=1 // pred_check_branch
      %97 = sbr.rel (0) target = $region37
    $region36: #{_lambda_.3} parent=1 // pred_region
      %98 = dma.done [#allocation6], 4096
    $region37: #{_lambda_.3} parent=1 // pred_fallthru
      _
    // Predicated region
    $region38: #{_lambda_.3} parent=1 // pred_check
      _
    $region39: #{_lambda_.3} parent=1 // pred_check_branch
      %100 = sbr.rel (0) target = $region41
    $region40: #{_lambda_.3} parent=1 // pred_region
      %101 = dma.done [#allocation9], 8192
    $region41: #{_lambda_.3} parent=1 // pred_fallthru
      _
    // Predicated region
    $region42: #{_lambda_.3} parent=1 // pred_check
      _
    $region43: #{_lambda_.3} parent=1 // pred_check_branch
      %103 = sbr.rel (0) target = $region45
    $region44: #{_lambda_.3} parent=1 // pred_region
      %104 = dma.done [#allocation9], 8192
    $region45: #{_lambda_.3} parent=1 // pred_fallthru
      _
    // Predicated region
    $region46: #{_lambda_.3} parent=1 // pred_check
      _
    $region47: #{_lambda_.3} parent=1 // pred_check_branch
      %106 = sbr.rel (0) target = $region49
    $region48: #{_lambda_.3} parent=1 // pred_region
      %107 = dma.done [#allocation12], 4096
    $region49: #{_lambda_.3} parent=1 // pred_fallthru
      _
    %v108 = vld [vmem:[#allocation2] sm:$0xff]
    %v109 = vld [vmem:[#allocation2 + $0x8] sm:$0xff]
    %v110 = vld [vmem:[#allocation2 + $0x10] sm:$0xff]
    %v111 = vld [vmem:[#allocation2 + $0x18] sm:$0xff]
    %v112 = vld [vmem:[#allocation8] sm:$0xff]
    %v113 = vld [vmem:[#allocation8 + $0x8] sm:$0xff]
    %v114 = vld [vmem:[#allocation8 + $0x10] sm:$0xff]
    %v115 = vld [vmem:[#allocation8 + $0x18] sm:$0xff]
    %v116 = vld [vmem:[#allocation8 + $0x20] sm:$0xff]
    %v117 = vld [vmem:[#allocation8 + $0x28] sm:$0xff]
    %v118 = vld [vmem:[#allocation8 + $0x30] sm:$0xff]
    %v119 = vld [vmem:[#allocation8 + $0x38] sm:$0xff]
    %v120 = vld [vmem:[#allocation8 + $0x40] sm:$0xff]
    %v121 = vld [vmem:[#allocation8 + $0x48] sm:$0xff]
    %v122 = vld [vmem:[#allocation8 + $0x50] sm:$0xff]
    %v123 = vld [vmem:[#allocation8 + $0x58] sm:$0xff]
    %v124 = vld [vmem:[#allocation8 + $0x60] sm:$0xff]
    %v125 = vld [vmem:[#allocation8 + $0x68] sm:$0xff]
    %v126 = vld [vmem:[#allocation8 + $0x70] sm:$0xff]
    %v127 = vld [vmem:[#allocation8 + $0x78] sm:$0xff]
    %v128 = vld [vmem:[#allocation8 + $0x80] sm:$0xff]
    %v129 = vld [vmem:[#allocation8 + $0x88] sm:$0xff]
    %v130 = vld [vmem:[#allocation8 + $0x90] sm:$0xff]
    %v131 = vld [vmem:[#allocation8 + $0x98] sm:$0xff]
    %v132 = vld [vmem:[#allocation8 + $0xa0] sm:$0xff]
    %v133 = vld [vmem:[#allocation8 + $0xa8] sm:$0xff]
    %v134 = vld [vmem:[#allocation8 + $0xb0] sm:$0xff]
    %v135 = vld [vmem:[#allocation8 + $0xb8] sm:$0xff]
    %v136 = vld [vmem:[#allocation8 + $0xc0] sm:$0xff]
    %v137 = vld [vmem:[#allocation8 + $0xc8] sm:$0xff]
    %v138 = vld [vmem:[#allocation8 + $0xd0] sm:$0xff]
    %v139 = vld [vmem:[#allocation8 + $0xd8] sm:$0xff]
    %v140 = vld [vmem:[#allocation8 + $0xe0] sm:$0xff]
    %v141 = vld [vmem:[#allocation8 + $0xe8] sm:$0xff]
    %v142 = vld [vmem:[#allocation8 + $0xf0] sm:$0xff]
    %v143 = vld [vmem:[#allocation8 + $0xf8] sm:$0xff]
    %v144 = vld [vmem:[#allocation8 + $0x100] sm:$0xff]
    %v145 = vld [vmem:[#allocation8 + $0x108] sm:$0xff]
    %v146 = vld [vmem:[#allocation8 + $0x110] sm:$0xff]
    %v147 = vld [vmem:[#allocation8 + $0x118] sm:$0xff]
    %v148 = vld [vmem:[#allocation8 + $0x120] sm:$0xff]
    %v149 = vld [vmem:[#allocation8 + $0x128] sm:$0xff]
    %v150 = vld [vmem:[#allocation8 + $0x130] sm:$0xff]
    %v151 = vld [vmem:[#allocation8 + $0x138] sm:$0xff]
    %v152 = vld [vmem:[#allocation8 + $0x140] sm:$0xff]
    %v153 = vld [vmem:[#allocation8 + $0x148] sm:$0xff]
    %v154 = vld [vmem:[#allocation8 + $0x150] sm:$0xff]
    %v155 = vld [vmem:[#allocation8 + $0x158] sm:$0xff]
    %v156 = vld [vmem:[#allocation8 + $0x160] sm:$0xff]
    %v157 = vld [vmem:[#allocation8 + $0x168] sm:$0xff]
    %v158 = vld [vmem:[#allocation8 + $0x170] sm:$0xff]
    %v159 = vld [vmem:[#allocation8 + $0x178] sm:$0xff]
    %v160 = vld [vmem:[#allocation8 + $0x180] sm:$0xff]
    %v161 = vld [vmem:[#allocation8 + $0x188] sm:$0xff]
    %v162 = vld [vmem:[#allocation8 + $0x190] sm:$0xff]
    %v163 = vld [vmem:[#allocation8 + $0x198] sm:$0xff]
    %v164 = vld [vmem:[#allocation8 + $0x1a0] sm:$0xff]
    %v165 = vld [vmem:[#allocation8 + $0x1a8] sm:$0xff]
    %v166 = vld [vmem:[#allocation8 + $0x1b0] sm:$0xff]
    %v167 = vld [vmem:[#allocation8 + $0x1b8] sm:$0xff]
    %v168 = vld [vmem:[#allocation8 + $0x1c0] sm:$0xff]
    %v169 = vld [vmem:[#allocation8 + $0x1c8] sm:$0xff]
    %v170 = vld [vmem:[#allocation8 + $0x1d0] sm:$0xff]
    %v171 = vld [vmem:[#allocation8 + $0x1d8] sm:$0xff]
    %v172 = vld [vmem:[#allocation8 + $0x1e0] sm:$0xff]
    %v173 = vld [vmem:[#allocation8 + $0x1e8] sm:$0xff]
    %v174 = vld [vmem:[#allocation8 + $0x1f0] sm:$0xff]
    %v175 = vld [vmem:[#allocation8 + $0x1f8] sm:$0xff]
    %176 = vmatprep.subr.mxu0 0.0
    %177 = vmatpush1.msra.mxu0 %v112
    %178 = vmatprep.subr.mxu0 0.0
    %179 = vmatpush1.msra.mxu0 %v113
    %180 = vmatprep.subr.mxu0 0.0
    %181 = vmatpush1.msra.mxu0 %v114
    %182 = vmatprep.subr.mxu0 0.0
    %183 = vmatpush1.msra.mxu0 %v115
    %184 = vmatprep.subr.mxu0 0.0
    %185 = vmatpush1.msra.mxu0 %v116
    %186 = vmatprep.subr.mxu0 0.0
    %187 = vmatpush1.msra.mxu0 %v117
    %188 = vmatprep.subr.mxu0 0.0
    %189 = vmatpush1.msra.mxu0 %v118
    %190 = vmatprep.subr.mxu0 0.0
    %191 = vmatpush1.msra.mxu0 %v119
    %192 = vmatprep.subr.mxu0 0.0
    %193 = vmatpush1.msra.mxu0 %v120
    %194 = vmatprep.subr.mxu0 0.0
    %195 = vmatpush1.msra.mxu0 %v121
    %196 = vmatprep.subr.mxu0 0.0
    %197 = vmatpush1.msra.mxu0 %v122
    %198 = vmatprep.subr.mxu0 0.0
    %199 = vmatpush1.msra.mxu0 %v123
    %200 = vmatprep.subr.mxu0 0.0
    %201 = vmatpush1.msra.mxu0 %v124
    %202 = vmatprep.subr.mxu0 0.0
    %203 = vmatpush1.msra.mxu0 %v125
    %204 = vmatprep.subr.mxu0 0.0
    %205 = vmatpush1.msra.mxu0 %v126
    %206 = vmatprep.subr.mxu0 0.0
    %207 = vmatpush1.msra.mxu0 %v127
    %208 = vmatprep.subr.mxu0 0.0
    %209 = vmatpush1.msra.mxu0 %v128
    %210 = vmatprep.subr.mxu0 0.0
    %211 = vmatpush1.msra.mxu0 %v129
    %212 = vmatprep.subr.mxu0 0.0
    %213 = vmatpush1.msra.mxu0 %v130
    %214 = vmatprep.subr.mxu0 0.0
    %215 = vmatpush1.msra.mxu0 %v131
    %216 = vmatprep.subr.mxu0 0.0
    %217 = vmatpush1.msra.mxu0 %v132
    %218 = vmatprep.subr.mxu0 0.0
    %219 = vmatpush1.msra.mxu0 %v133
    %220 = vmatprep.subr.mxu0 0.0
    %221 = vmatpush1.msra.mxu0 %v134
    %222 = vmatprep.subr.mxu0 0.0
    %223 = vmatpush1.msra.mxu0 %v135
    %224 = vmatprep.subr.mxu0 0.0
    %225 = vmatpush1.msra.mxu0 %v136
    %226 = vmatprep.subr.mxu0 0.0
    %227 = vmatpush1.msra.mxu0 %v137
    %228 = vmatprep.subr.mxu0 0.0
    %229 = vmatpush1.msra.mxu0 %v138
    %230 = vmatprep.subr.mxu0 0.0
    %231 = vmatpush1.msra.mxu0 %v139
    %232 = vmatprep.subr.mxu0 0.0
    %233 = vmatpush1.msra.mxu0 %v140
    %234 = vmatprep.subr.mxu0 0.0
    %235 = vmatpush1.msra.mxu0 %v141
    %236 = vmatprep.subr.mxu0 0.0
    %237 = vmatpush1.msra.mxu0 %v142
    %238 = vmatprep.subr.mxu0 0.0
    %239 = vmatpush1.msra.mxu0 %v143
    %240 = vmatprep.mubr.f32.mxu0 %v109
    %241 = vmatmul.mubr.f32.gmra.mrb[0].mxu0 %v108
    %v242 = vpop.f32.mrb[0].mxu0
    %v243 = vadd.f32 0.0, %v242
    %v244 = vpop.f32.mrb[0].mxu0
    %245 = vdwg.mxu0
    %246 = vmatprep.subr.mxu0 0.0
    %247 = vmatpush1.msra.mxu0 %v144
    %248 = vmatprep.subr.mxu0 0.0
    %249 = vmatpush1.msra.mxu0 %v145
    %250 = vmatprep.subr.mxu0 0.0
    %251 = vmatpush1.msra.mxu0 %v146
    %252 = vmatprep.subr.mxu0 0.0
    %253 = vmatpush1.msra.mxu0 %v147
    %254 = vmatprep.subr.mxu0 0.0
    %255 = vmatpush1.msra.mxu0 %v148
    %256 = vmatprep.subr.mxu0 0.0
    %257 = vmatpush1.msra.mxu0 %v149
    %258 = vmatprep.subr.mxu0 0.0
    %259 = vmatpush1.msra.mxu0 %v150
    %260 = vmatprep.subr.mxu0 0.0
    %261 = vmatpush1.msra.mxu0 %v151
    %262 = vmatprep.subr.mxu0 0.0
    %263 = vmatpush1.msra.mxu0 %v152
    %264 = vmatprep.subr.mxu0 0.0
    %265 = vmatpush1.msra.mxu0 %v153
    %266 = vmatprep.subr.mxu0 0.0
    %267 = vmatpush1.msra.mxu0 %v154
    %268 = vmatprep.subr.mxu0 0.0
    %269 = vmatpush1.msra.mxu0 %v155
    %270 = vmatprep.subr.mxu0 0.0
    %271 = vmatpush1.msra.mxu0 %v156
    %272 = vmatprep.subr.mxu0 0.0
    %273 = vmatpush1.msra.mxu0 %v157
    %274 = vmatprep.subr.mxu0 0.0
    %275 = vmatpush1.msra.mxu0 %v158
    %276 = vmatprep.subr.mxu0 0.0
    %277 = vmatpush1.msra.mxu0 %v159
    %278 = vmatprep.subr.mxu0 0.0
    %279 = vmatpush1.msra.mxu0 %v160
    %280 = vmatprep.subr.mxu0 0.0
    %281 = vmatpush1.msra.mxu0 %v161
    %282 = vmatprep.subr.mxu0 0.0
    %283 = vmatpush1.msra.mxu0 %v162
    %284 = vmatprep.subr.mxu0 0.0
    %285 = vmatpush1.msra.mxu0 %v163
    %286 = vmatprep.subr.mxu0 0.0
    %287 = vmatpush1.msra.mxu0 %v164
    %288 = vmatprep.subr.mxu0 0.0
    %289 = vmatpush1.msra.mxu0 %v165
    %290 = vmatprep.subr.mxu0 0.0
    %291 = vmatpush1.msra.mxu0 %v166
    %292 = vmatprep.subr.mxu0 0.0
    %293 = vmatpush1.msra.mxu0 %v167
    %294 = vmatprep.subr.mxu0 0.0
    %295 = vmatpush1.msra.mxu0 %v168
    %296 = vmatprep.subr.mxu0 0.0
    %297 = vmatpush1.msra.mxu0 %v169
    %298 = vmatprep.subr.mxu0 0.0
    %299 = vmatpush1.msra.mxu0 %v170
    %300 = vmatprep.subr.mxu0 0.0
    %301 = vmatpush1.msra.mxu0 %v171
    %302 = vmatprep.subr.mxu0 0.0
    %303 = vmatpush1.msra.mxu0 %v172
    %304 = vmatprep.subr.mxu0 0.0
    %305 = vmatpush1.msra.mxu0 %v173
    %306 = vmatprep.subr.mxu0 0.0
    %307 = vmatpush1.msra.mxu0 %v174
    %308 = vmatprep.subr.mxu0 0.0
    %309 = vmatpush1.msra.mxu0 %v175
    %310 = vmatprep.mubr.f32.mxu0 %v111
    %311 = vmatmul.mubr.f32.gmra.mrb[0].mxu0 %v110
    %v312 = vpop.f32.mrb[0].mxu0
    %v313 = vadd.f32 %v243, %v312
    %v314 = vpop.f32.mrb[0].mxu0
    %315 = vdwg.mxu0
    %316 = vst [vmem:[#allocation13] sm:$0xff] %v313
    %v317 = vld [vmem:[#allocation5] sm:$0xff]
    %v318 = vld [vmem:[#allocation5 + $0x8] sm:$0xff]
    %v319 = vld [vmem:[#allocation5 + $0x10] sm:$0xff]
    %v320 = vld [vmem:[#allocation5 + $0x18] sm:$0xff]
    %v321 = vld [vmem:[#allocation5 + $0x20] sm:$0xff]
    %v322 = vld [vmem:[#allocation5 + $0x28] sm:$0xff]
    %v323 = vld [vmem:[#allocation5 + $0x30] sm:$0xff]
    %v324 = vld [vmem:[#allocation5 + $0x38] sm:$0xff]
    %v325 = vld [vmem:[#allocation5 + $0x40] sm:$0xff]
    %v326 = vld [vmem:[#allocation5 + $0x48] sm:$0xff]
    %v327 = vld [vmem:[#allocation5 + $0x50] sm:$0xff]
    %v328 = vld [vmem:[#allocation5 + $0x58] sm:$0xff]
    %v329 = vld [vmem:[#allocation5 + $0x60] sm:$0xff]
    %v330 = vld [vmem:[#allocation5 + $0x68] sm:$0xff]
    %v331 = vld [vmem:[#allocation5 + $0x70] sm:$0xff]
    %v332 = vld [vmem:[#allocation5 + $0x78] sm:$0xff]
    %v333 = vld [vmem:[#allocation10] sm:$0xff]
    %v334 = vld [vmem:[#allocation10 + $0x8] sm:$0xff]
    %v335 = vld [vmem:[#allocation10 + $0x10] sm:$0xff]
    %v336 = vld [vmem:[#allocation10 + $0x18] sm:$0xff]
    %v337 = vld [vmem:[#allocation10 + $0x20] sm:$0xff]
    %v338 = vld [vmem:[#allocation10 + $0x28] sm:$0xff]
    %v339 = vld [vmem:[#allocation10 + $0x30] sm:$0xff]
    %v340 = vld [vmem:[#allocation10 + $0x38] sm:$0xff]
    %v341 = vld [vmem:[#allocation10 + $0x40] sm:$0xff]
    %v342 = vld [vmem:[#allocation10 + $0x48] sm:$0xff]
    %v343 = vld [vmem:[#allocation10 + $0x50] sm:$0xff]
    %v344 = vld [vmem:[#allocation10 + $0x58] sm:$0xff]
    %v345 = vld [vmem:[#allocation10 + $0x60] sm:$0xff]
    %v346 = vld [vmem:[#allocation10 + $0x68] sm:$0xff]
    %v347 = vld [vmem:[#allocation10 + $0x70] sm:$0xff]
    %v348 = vld [vmem:[#allocation10 + $0x78] sm:$0xff]
    %v349 = vld [vmem:[#allocation10 + $0x80] sm:$0xff]
    %v350 = vld [vmem:[#allocation10 + $0x88] sm:$0xff]
    %v351 = vld [vmem:[#allocation10 + $0x90] sm:$0xff]
    %v352 = vld [vmem:[#allocation10 + $0x98] sm:$0xff]
    %v353 = vld [vmem:[#allocation10 + $0xa0] sm:$0xff]
    %v354 = vld [vmem:[#allocation10 + $0xa8] sm:$0xff]
    %v355 = vld [vmem:[#allocation10 + $0xb0] sm:$0xff]
    %v356 = vld [vmem:[#allocation10 + $0xb8] sm:$0xff]
    %v357 = vld [vmem:[#allocation10 + $0xc0] sm:$0xff]
    %v358 = vld [vmem:[#allocation10 + $0xc8] sm:$0xff]
    %v359 = vld [vmem:[#allocation10 + $0xd0] sm:$0xff]
    %v360 = vld [vmem:[#allocation10 + $0xd8] sm:$0xff]
    %v361 = vld [vmem:[#allocation10 + $0xe0] sm:$0xff]
    %v362 = vld [vmem:[#allocation10 + $0xe8] sm:$0xff]
    %v363 = vld [vmem:[#allocation10 + $0xf0] sm:$0xff]
    %v364 = vld [vmem:[#allocation10 + $0xf8] sm:$0xff]
    %v365 = vld [vmem:[#allocation10 + $0x100] sm:$0xff]
    %v366 = vld [vmem:[#allocation10 + $0x108] sm:$0xff]
    %v367 = vld [vmem:[#allocation10 + $0x110] sm:$0xff]
    %v368 = vld [vmem:[#allocation10 + $0x118] sm:$0xff]
    %v369 = vld [vmem:[#allocation10 + $0x120] sm:$0xff]
    %v370 = vld [vmem:[#allocation10 + $0x128] sm:$0xff]
    %v371 = vld [vmem:[#allocation10 + $0x130] sm:$0xff]
    %v372 = vld [vmem:[#allocation10 + $0x138] sm:$0xff]
    %v373 = vld [vmem:[#allocation10 + $0x140] sm:$0xff]
    %v374 = vld [vmem:[#allocation10 + $0x148] sm:$0xff]
    %v375 = vld [vmem:[#allocation10 + $0x150] sm:$0xff]
    %v376 = vld [vmem:[#allocation10 + $0x158] sm:$0xff]
    %v377 = vld [vmem:[#allocation10 + $0x160] sm:$0xff]
    %v378 = vld [vmem:[#allocation10 + $0x168] sm:$0xff]
    %v379 = vld [vmem:[#allocation10 + $0x170] sm:$0xff]
    %v380 = vld [vmem:[#allocation10 + $0x178] sm:$0xff]
    %v381 = vld [vmem:[#allocation10 + $0x180] sm:$0xff]
    %v382 = vld [vmem:[#allocation10 + $0x188] sm:$0xff]
    %v383 = vld [vmem:[#allocation10 + $0x190] sm:$0xff]
    %v384 = vld [vmem:[#allocation10 + $0x198] sm:$0xff]
    %v385 = vld [vmem:[#allocation10 + $0x1a0] sm:$0xff]
    %v386 = vld [vmem:[#allocation10 + $0x1a8] sm:$0xff]
    %v387 = vld [vmem:[#allocation10 + $0x1b0] sm:$0xff]
    %v388 = vld [vmem:[#allocation10 + $0x1b8] sm:$0xff]
    %v389 = vld [vmem:[#allocation10 + $0x1c0] sm:$0xff]
    %v390 = vld [vmem:[#allocation10 + $0x1c8] sm:$0xff]
    %v391 = vld [vmem:[#allocation10 + $0x1d0] sm:$0xff]
    %v392 = vld [vmem:[#allocation10 + $0x1d8] sm:$0xff]
    %v393 = vld [vmem:[#allocation10 + $0x1e0] sm:$0xff]
    %v394 = vld [vmem:[#allocation10 + $0x1e8] sm:$0xff]
    %v395 = vld [vmem:[#allocation10 + $0x1f0] sm:$0xff]
    %v396 = vld [vmem:[#allocation10 + $0x1f8] sm:$0xff]
    %397 = vmatprep.subr.mxu0 0.0
    %398 = vmatpush1.msra.mxu0 %v333
    %399 = vmatprep.subr.mxu0 0.0
    %400 = vmatpush1.msra.mxu0 %v334
    %401 = vmatprep.subr.mxu0 0.0
    %402 = vmatpush1.msra.mxu0 %v335
    %403 = vmatprep.subr.mxu0 0.0
    %404 = vmatpush1.msra.mxu0 %v336
    %405 = vmatprep.subr.mxu0 0.0
    %406 = vmatpush1.msra.mxu0 %v337
    %407 = vmatprep.subr.mxu0 0.0
    %408 = vmatpush1.msra.mxu0 %v338
    %409 = vmatprep.subr.mxu0 0.0
    %410 = vmatpush1.msra.mxu0 %v339
    %411 = vmatprep.subr.mxu0 0.0
    %412 = vmatpush1.msra.mxu0 %v340
    %413 = vmatprep.subr.mxu0 0.0
    %414 = vmatpush1.msra.mxu0 %v341
    %415 = vmatprep.subr.mxu0 0.0
    %416 = vmatpush1.msra.mxu0 %v342
    %417 = vmatprep.subr.mxu0 0.0
    %418 = vmatpush1.msra.mxu0 %v343
    %419 = vmatprep.subr.mxu0 0.0
    %420 = vmatpush1.msra.mxu0 %v344
    %421 = vmatprep.subr.mxu0 0.0
    %422 = vmatpush1.msra.mxu0 %v345
    %423 = vmatprep.subr.mxu0 0.0
    %424 = vmatpush1.msra.mxu0 %v346
    %425 = vmatprep.subr.mxu0 0.0
    %426 = vmatpush1.msra.mxu0 %v347
    %427 = vmatprep.subr.mxu0 0.0
    %428 = vmatpush1.msra.mxu0 %v348
    %429 = vmatprep.subr.mxu0 0.0
    %430 = vmatpush1.msra.mxu0 %v349
    %431 = vmatprep.subr.mxu0 0.0
    %432 = vmatpush1.msra.mxu0 %v350
    %433 = vmatprep.subr.mxu0 0.0
    %434 = vmatpush1.msra.mxu0 %v351
    %435 = vmatprep.subr.mxu0 0.0
    %436 = vmatpush1.msra.mxu0 %v352
    %437 = vmatprep.subr.mxu0 0.0
    %438 = vmatpush1.msra.mxu0 %v353
    %439 = vmatprep.subr.mxu0 0.0
    %440 = vmatpush1.msra.mxu0 %v354
    %441 = vmatprep.subr.mxu0 0.0
    %442 = vmatpush1.msra.mxu0 %v355
    %443 = vmatprep.subr.mxu0 0.0
    %444 = vmatpush1.msra.mxu0 %v356
    %445 = vmatprep.subr.mxu0 0.0
    %446 = vmatpush1.msra.mxu0 %v357
    %447 = vmatprep.subr.mxu0 0.0
    %448 = vmatpush1.msra.mxu0 %v358
    %449 = vmatprep.subr.mxu0 0.0
    %450 = vmatpush1.msra.mxu0 %v359
    %451 = vmatprep.subr.mxu0 0.0
    %452 = vmatpush1.msra.mxu0 %v360
    %453 = vmatprep.subr.mxu0 0.0
    %454 = vmatpush1.msra.mxu0 %v361
    %455 = vmatprep.subr.mxu0 0.0
    %456 = vmatpush1.msra.mxu0 %v362
    %457 = vmatprep.subr.mxu0 0.0
    %458 = vmatpush1.msra.mxu0 %v363
    %459 = vmatprep.subr.mxu0 0.0
    %460 = vmatpush1.msra.mxu0 %v364
    %461 = vmatprep.mubr.f32.mxu0 %v318
    %462 = vmatmul.mubr.f32.gmra.mrb[0].mxu0 %v317
    %v463 = vpop.f32.mrb[0].mxu0
    %v464 = vadd.f32 0.0, %v463
    %v465 = vpop.f32.mrb[0].mxu0
    %466 = vmatprep.mubr.f32.mxu0 %v322
    %467 = vmatmul.mubr.f32.gmra.mrb[0].mxu0 %v321
    %v468 = vpop.f32.mrb[0].mxu0
    %v469 = vadd.f32 0.0, %v468
    %v470 = vpop.f32.mrb[0].mxu0
    %471 = vmatprep.mubr.f32.mxu0 %v326
    %472 = vmatmul.mubr.f32.gmra.mrb[0].mxu0 %v325
    %v473 = vpop.f32.mrb[0].mxu0
    %v474 = vadd.f32 0.0, %v473
    %v475 = vpop.f32.mrb[0].mxu0
    %476 = vmatprep.mubr.f32.mxu0 %v330
    %477 = vmatmul.mubr.f32.gmra.mrb[0].mxu0 %v329
    %v478 = vpop.f32.mrb[0].mxu0
    %v479 = vadd.f32 0.0, %v478
    %v480 = vpop.f32.mrb[0].mxu0
    %481 = vdwg.mxu0
    %482 = vmatprep.subr.mxu0 0.0
    %483 = vmatpush1.msra.mxu0 %v365
    %484 = vmatprep.subr.mxu0 0.0
    %485 = vmatpush1.msra.mxu0 %v366
    %486 = vmatprep.subr.mxu0 0.0
    %487 = vmatpush1.msra.mxu0 %v367
    %488 = vmatprep.subr.mxu0 0.0
    %489 = vmatpush1.msra.mxu0 %v368
    %490 = vmatprep.subr.mxu0 0.0
    %491 = vmatpush1.msra.mxu0 %v369
    %492 = vmatprep.subr.mxu0 0.0
    %493 = vmatpush1.msra.mxu0 %v370
    %494 = vmatprep.subr.mxu0 0.0
    %495 = vmatpush1.msra.mxu0 %v371
    %496 = vmatprep.subr.mxu0 0.0
    %497 = vmatpush1.msra.mxu0 %v372
    %498 = vmatprep.subr.mxu0 0.0
    %499 = vmatpush1.msra.mxu0 %v373
    %500 = vmatprep.subr.mxu0 0.0
    %501 = vmatpush1.msra.mxu0 %v374
    %502 = vmatprep.subr.mxu0 0.0
    %503 = vmatpush1.msra.mxu0 %v375
    %504 = vmatprep.subr.mxu0 0.0
    %505 = vmatpush1.msra.mxu0 %v376
    %506 = vmatprep.subr.mxu0 0.0
    %507 = vmatpush1.msra.mxu0 %v377
    %508 = vmatprep.subr.mxu0 0.0
    %509 = vmatpush1.msra.mxu0 %v378
    %510 = vmatprep.subr.mxu0 0.0
    %511 = vmatpush1.msra.mxu0 %v379
    %512 = vmatprep.subr.mxu0 0.0
    %513 = vmatpush1.msra.mxu0 %v380
    %514 = vmatprep.subr.mxu0 0.0
    %515 = vmatpush1.msra.mxu0 %v381
    %516 = vmatprep.subr.mxu0 0.0
    %517 = vmatpush1.msra.mxu0 %v382
    %518 = vmatprep.subr.mxu0 0.0
    %519 = vmatpush1.msra.mxu0 %v383
    %520 = vmatprep.subr.mxu0 0.0
    %521 = vmatpush1.msra.mxu0 %v384
    %522 = vmatprep.subr.mxu0 0.0
    %523 = vmatpush1.msra.mxu0 %v385
    %524 = vmatprep.subr.mxu0 0.0
    %525 = vmatpush1.msra.mxu0 %v386
    %526 = vmatprep.subr.mxu0 0.0
    %527 = vmatpush1.msra.mxu0 %v387
    %528 = vmatprep.subr.mxu0 0.0
    %529 = vmatpush1.msra.mxu0 %v388
    %530 = vmatprep.subr.mxu0 0.0
    %531 = vmatpush1.msra.mxu0 %v389
    %532 = vmatprep.subr.mxu0 0.0
    %533 = vmatpush1.msra.mxu0 %v390
    %534 = vmatprep.subr.mxu0 0.0
    %535 = vmatpush1.msra.mxu0 %v391
    %536 = vmatprep.subr.mxu0 0.0
    %537 = vmatpush1.msra.mxu0 %v392
    %538 = vmatprep.subr.mxu0 0.0
    %539 = vmatpush1.msra.mxu0 %v393
    %540 = vmatprep.subr.mxu0 0.0
    %541 = vmatpush1.msra.mxu0 %v394
    %542 = vmatprep.subr.mxu0 0.0
    %543 = vmatpush1.msra.mxu0 %v395
    %544 = vmatprep.subr.mxu0 0.0
    %545 = vmatpush1.msra.mxu0 %v396
    %546 = vmatprep.mubr.f32.mxu0 %v320
    %547 = vmatmul.mubr.f32.gmra.mrb[0].mxu0 %v319
    %v548 = vpop.f32.mrb[0].mxu0
    %v549 = vadd.f32 %v464, %v548
    %v550 = vpop.f32.mrb[0].mxu0
    %551 = vmatprep.mubr.f32.mxu0 %v324
    %552 = vmatmul.mubr.f32.gmra.mrb[0].mxu0 %v323
    %v553 = vpop.f32.mrb[0].mxu0
    %v554 = vadd.f32 %v469, %v553
    %v555 = vpop.f32.mrb[0].mxu0
    %556 = vmatprep.mubr.f32.mxu0 %v328
    %557 = vmatmul.mubr.f32.gmra.mrb[0].mxu0 %v327
    %v558 = vpop.f32.mrb[0].mxu0
    %v559 = vadd.f32 %v474, %v558
    %v560 = vpop.f32.mrb[0].mxu0
    %561 = vmatprep.mubr.f32.mxu0 %v332
    %562 = vmatmul.mubr.f32.gmra.mrb[0].mxu0 %v331
    %v563 = vpop.f32.mrb[0].mxu0
    %v564 = vadd.f32 %v479, %v563
    %v565 = vpop.f32.mrb[0].mxu0
    %566 = vdwg.mxu0
    %567 = vst [vmem:[#allocation14] sm:$0xff] %v549
    %568 = vst [vmem:[#allocation14 + $0x8] sm:$0xff] %v554
    %569 = vst [vmem:[#allocation14 + $0x10] sm:$0xff] %v559
    %570 = vst [vmem:[#allocation14 + $0x18] sm:$0xff] %v564
    %v571 = vld [vmem:[#allocation7] sm:$0xff]
    %v572 = vld [vmem:[#allocation7 + $0x8] sm:$0xff]
    %v573 = vld [vmem:[#allocation7 + $0x10] sm:$0xff]
    %v574 = vld [vmem:[#allocation7 + $0x18] sm:$0xff]
    %v575 = vld [vmem:[#allocation7 + $0x20] sm:$0xff]
    %v576 = vld [vmem:[#allocation7 + $0x28] sm:$0xff]
    %v577 = vld [vmem:[#allocation7 + $0x30] sm:$0xff]
    %v578 = vld [vmem:[#allocation7 + $0x38] sm:$0xff]
    %v579 = vld [vmem:[#allocation7 + $0x40] sm:$0xff]
    %v580 = vld [vmem:[#allocation7 + $0x48] sm:$0xff]
    %v581 = vld [vmem:[#allocation7 + $0x50] sm:$0xff]
    %v582 = vld [vmem:[#allocation7 + $0x58] sm:$0xff]
    %v583 = vld [vmem:[#allocation7 + $0x60] sm:$0xff]
    %v584 = vld [vmem:[#allocation7 + $0x68] sm:$0xff]
    %v585 = vld [vmem:[#allocation7 + $0x70] sm:$0xff]
    %v586 = vld [vmem:[#allocation7 + $0x78] sm:$0xff]
    %v587 = vld [vmem:[#allocation7 + $0x80] sm:$0xff]
    %v588 = vld [vmem:[#allocation7 + $0x88] sm:$0xff]
    %v589 = vld [vmem:[#allocation7 + $0x90] sm:$0xff]
    %v590 = vld [vmem:[#allocation7 + $0x98] sm:$0xff]
    %v591 = vld [vmem:[#allocation7 + $0xa0] sm:$0xff]
    %v592 = vld [vmem:[#allocation7 + $0xa8] sm:$0xff]
    %v593 = vld [vmem:[#allocation7 + $0xb0] sm:$0xff]
    %v594 = vld [vmem:[#allocation7 + $0xb8] sm:$0xff]
    %v595 = vld [vmem:[#allocation7 + $0xc0] sm:$0xff]
    %v596 = vld [vmem:[#allocation7 + $0xc8] sm:$0xff]
    %v597 = vld [vmem:[#allocation7 + $0xd0] sm:$0xff]
    %v598 = vld [vmem:[#allocation7 + $0xd8] sm:$0xff]
    %v599 = vld [vmem:[#allocation7 + $0xe0] sm:$0xff]
    %v600 = vld [vmem:[#allocation7 + $0xe8] sm:$0xff]
    %v601 = vld [vmem:[#allocation7 + $0xf0] sm:$0xff]
    %v602 = vld [vmem:[#allocation7 + $0xf8] sm:$0xff]
    %v603 = vld [vmem:[#allocation11] sm:$0xff]
    %v604 = vld [vmem:[#allocation11 + $0x8] sm:$0xff]
    %v605 = vld [vmem:[#allocation11 + $0x10] sm:$0xff]
    %v606 = vld [vmem:[#allocation11 + $0x18] sm:$0xff]
    %v607 = vld [vmem:[#allocation11 + $0x20] sm:$0xff]
    %v608 = vld [vmem:[#allocation11 + $0x28] sm:$0xff]
    %v609 = vld [vmem:[#allocation11 + $0x30] sm:$0xff]
    %v610 = vld [vmem:[#allocation11 + $0x38] sm:$0xff]
    %v611 = vld [vmem:[#allocation11 + $0x40] sm:$0xff]
    %v612 = vld [vmem:[#allocation11 + $0x48] sm:$0xff]
    %v613 = vld [vmem:[#allocation11 + $0x50] sm:$0xff]
    %v614 = vld [vmem:[#allocation11 + $0x58] sm:$0xff]
    %v615 = vld [vmem:[#allocation11 + $0x60] sm:$0xff]
    %v616 = vld [vmem:[#allocation11 + $0x68] sm:$0xff]
    %v617 = vld [vmem:[#allocation11 + $0x70] sm:$0xff]
    %v618 = vld [vmem:[#allocation11 + $0x78] sm:$0xff]
    %v619 = vld [vmem:[#allocation11 + $0x80] sm:$0xff]
    %v620 = vld [vmem:[#allocation11 + $0x88] sm:$0xff]
    %v621 = vld [vmem:[#allocation11 + $0x90] sm:$0xff]
    %v622 = vld [vmem:[#allocation11 + $0x98] sm:$0xff]
    %v623 = vld [vmem:[#allocation11 + $0xa0] sm:$0xff]
    %v624 = vld [vmem:[#allocation11 + $0xa8] sm:$0xff]
    %v625 = vld [vmem:[#allocation11 + $0xb0] sm:$0xff]
    %v626 = vld [vmem:[#allocation11 + $0xb8] sm:$0xff]
    %v627 = vld [vmem:[#allocation11 + $0xc0] sm:$0xff]
    %v628 = vld [vmem:[#allocation11 + $0xc8] sm:$0xff]
    %v629 = vld [vmem:[#allocation11 + $0xd0] sm:$0xff]
    %v630 = vld [vmem:[#allocation11 + $0xd8] sm:$0xff]
    %v631 = vld [vmem:[#allocation11 + $0xe0] sm:$0xff]
    %v632 = vld [vmem:[#allocation11 + $0xe8] sm:$0xff]
    %v633 = vld [vmem:[#allocation11 + $0xf0] sm:$0xff]
    %v634 = vld [vmem:[#allocation11 + $0xf8] sm:$0xff]
    %635 = vmatprep.subr.mxu0 0.0
    %636 = vmatpush1.msra.mxu0 %v603
    %637 = vmatprep.subr.mxu0 0.0
    %638 = vmatpush1.msra.mxu0 %v604
    %639 = vmatprep.subr.mxu0 0.0
    %640 = vmatpush1.msra.mxu0 %v605
    %641 = vmatprep.subr.mxu0 0.0
    %642 = vmatpush1.msra.mxu0 %v606
    %643 = vmatprep.subr.mxu0 0.0
    %644 = vmatpush1.msra.mxu0 %v607
    %645 = vmatprep.subr.mxu0 0.0
    %646 = vmatpush1.msra.mxu0 %v608
    %647 = vmatprep.subr.mxu0 0.0
    %648 = vmatpush1.msra.mxu0 %v609
    %649 = vmatprep.subr.mxu0 0.0
    %650 = vmatpush1.msra.mxu0 %v610
    %651 = vmatprep.subr.mxu0 0.0
    %652 = vmatpush1.msra.mxu0 %v611
    %653 = vmatprep.subr.mxu0 0.0
    %654 = vmatpush1.msra.mxu0 %v612
    %655 = vmatprep.subr.mxu0 0.0
    %656 = vmatpush1.msra.mxu0 %v613
    %657 = vmatprep.subr.mxu0 0.0
    %658 = vmatpush1.msra.mxu0 %v614
    %659 = vmatprep.subr.mxu0 0.0
    %660 = vmatpush1.msra.mxu0 %v615
    %661 = vmatprep.subr.mxu0 0.0
    %662 = vmatpush1.msra.mxu0 %v616
    %663 = vmatprep.subr.mxu0 0.0
    %664 = vmatpush1.msra.mxu0 %v617
    %665 = vmatprep.subr.mxu0 0.0
    %666 = vmatpush1.msra.mxu0 %v618
    %667 = vmatprep.subr.mxu0 0.0
    %668 = vmatpush1.msra.mxu0 %v619
    %669 = vmatprep.subr.mxu0 0.0
    %670 = vmatpush1.msra.mxu0 %v620
    %671 = vmatprep.subr.mxu0 0.0
    %672 = vmatpush1.msra.mxu0 %v621
    %673 = vmatprep.subr.mxu0 0.0
    %674 = vmatpush1.msra.mxu0 %v622
    %675 = vmatprep.subr.mxu0 0.0
    %676 = vmatpush1.msra.mxu0 %v623
    %677 = vmatprep.subr.mxu0 0.0
    %678 = vmatpush1.msra.mxu0 %v624
    %679 = vmatprep.subr.mxu0 0.0
    %680 = vmatpush1.msra.mxu0 %v625
    %681 = vmatprep.subr.mxu0 0.0
    %682 = vmatpush1.msra.mxu0 %v626
    %683 = vmatprep.subr.mxu0 0.0
    %684 = vmatpush1.msra.mxu0 %v627
    %685 = vmatprep.subr.mxu0 0.0
    %686 = vmatpush1.msra.mxu0 %v628
    %687 = vmatprep.subr.mxu0 0.0
    %688 = vmatpush1.msra.mxu0 %v629
    %689 = vmatprep.subr.mxu0 0.0
    %690 = vmatpush1.msra.mxu0 %v630
    %691 = vmatprep.subr.mxu0 0.0
    %692 = vmatpush1.msra.mxu0 %v631
    %693 = vmatprep.subr.mxu0 0.0
    %694 = vmatpush1.msra.mxu0 %v632
    %695 = vmatprep.subr.mxu0 0.0
    %696 = vmatpush1.msra.mxu0 %v633
    %697 = vmatprep.subr.mxu0 0.0
    %698 = vmatpush1.msra.mxu0 %v634
    %699 = vmatprep.mubr.f32.mxu0 %v572
    %700 = vmatmul.mubr.f32.gmra.mrb[0].mxu0 %v571
    %v701 = vpop.f32.mrb[0].mxu0
    %v702 = vadd.f32 0.0, %v701
    %v703 = vpop.f32.mrb[0].mxu0
    %704 = vmatprep.mubr.f32.mxu0 %v574
    %705 = vmatmul.mubr.f32.gmra.mrb[0].mxu0 %v573
    %v706 = vpop.f32.mrb[0].mxu0
    %v707 = vadd.f32 0.0, %v706
    %v708 = vpop.f32.mrb[0].mxu0
    %709 = vmatprep.mubr.f32.mxu0 %v576
    %710 = vmatmul.mubr.f32.gmra.mrb[0].mxu0 %v575
    %v711 = vpop.f32.mrb[0].mxu0
    %v712 = vadd.f32 0.0, %v711
    %v713 = vpop.f32.mrb[0].mxu0
    %714 = vmatprep.mubr.f32.mxu0 %v578
    %715 = vmatmul.mubr.f32.gmra.mrb[0].mxu0 %v577
    %v716 = vpop.f32.mrb[0].mxu0
    %v717 = vadd.f32 0.0, %v716
    %v718 = vpop.f32.mrb[0].mxu0
    %719 = vmatprep.mubr.f32.mxu0 %v580
    %720 = vmatmul.mubr.f32.gmra.mrb[0].mxu0 %v579
    %v721 = vpop.f32.mrb[0].mxu0
    %v722 = vadd.f32 0.0, %v721
    %v723 = vpop.f32.mrb[0].mxu0
    %724 = vmatprep.mubr.f32.mxu0 %v582
    %725 = vmatmul.mubr.f32.gmra.mrb[0].mxu0 %v581
    %v726 = vpop.f32.mrb[0].mxu0
    %v727 = vadd.f32 0.0, %v726
    %v728 = vpop.f32.mrb[0].mxu0
    %729 = vmatprep.mubr.f32.mxu0 %v584
    %730 = vmatmul.mubr.f32.gmra.mrb[0].mxu0 %v583
    %v731 = vpop.f32.mrb[0].mxu0
    %v732 = vadd.f32 0.0, %v731
    %v733 = vpop.f32.mrb[0].mxu0
    %734 = vmatprep.mubr.f32.mxu0 %v586
    %735 = vmatmul.mubr.f32.gmra.mrb[0].mxu0 %v585
    %v736 = vpop.f32.mrb[0].mxu0
    %v737 = vadd.f32 0.0, %v736
    %v738 = vpop.f32.mrb[0].mxu0
    %739 = vmatprep.mubr.f32.mxu0 %v588
    %740 = vmatmul.mubr.f32.gmra.mrb[0].mxu0 %v587
    %v741 = vpop.f32.mrb[0].mxu0
    %v742 = vadd.f32 0.0, %v741
    %v743 = vpop.f32.mrb[0].mxu0
    %744 = vmatprep.mubr.f32.mxu0 %v590
    %745 = vmatmul.mubr.f32.gmra.mrb[0].mxu0 %v589
    %v746 = vpop.f32.mrb[0].mxu0
    %v747 = vadd.f32 0.0, %v746
    %v748 = vpop.f32.mrb[0].mxu0
    %749 = vmatprep.mubr.f32.mxu0 %v592
    %750 = vmatmul.mubr.f32.gmra.mrb[0].mxu0 %v591
    %v751 = vpop.f32.mrb[0].mxu0
    %v752 = vadd.f32 0.0, %v751
    %v753 = vpop.f32.mrb[0].mxu0
    %754 = vmatprep.mubr.f32.mxu0 %v594
    %755 = vmatmul.mubr.f32.gmra.mrb[0].mxu0 %v593
    %v756 = vpop.f32.mrb[0].mxu0
    %v757 = vadd.f32 0.0, %v756
    %v758 = vpop.f32.mrb[0].mxu0
    %759 = vmatprep.mubr.f32.mxu0 %v596
    %760 = vmatmul.mubr.f32.gmra.mrb[0].mxu0 %v595
    %v761 = vpop.f32.mrb[0].mxu0
    %v762 = vadd.f32 0.0, %v761
    %v763 = vpop.f32.mrb[0].mxu0
    %764 = vmatprep.mubr.f32.mxu0 %v598
    %765 = vmatmul.mubr.f32.gmra.mrb[0].mxu0 %v597
    %v766 = vpop.f32.mrb[0].mxu0
    %v767 = vadd.f32 0.0, %v766
    %v768 = vpop.f32.mrb[0].mxu0
    %769 = vmatprep.mubr.f32.mxu0 %v600
    %770 = vmatmul.mubr.f32.gmra.mrb[0].mxu0 %v599
    %v771 = vpop.f32.mrb[0].mxu0
    %v772 = vadd.f32 0.0, %v771
    %v773 = vpop.f32.mrb[0].mxu0
    %774 = vmatprep.mubr.f32.mxu0 %v602
    %775 = vmatmul.mubr.f32.gmra.mrb[0].mxu0 %v601
    %v776 = vpop.f32.mrb[0].mxu0
    %v777 = vadd.f32 0.0, %v776
    %v778 = vpop.f32.mrb[0].mxu0
    %779 = vdwg.mxu0
    %780 = vst [vmem:[#allocation16] sm:$0xff] %v702
    %781 = vst [vmem:[#allocation16 + $0x8] sm:$0xff] %v707
    %782 = vst [vmem:[#allocation16 + $0x10] sm:$0xff] %v712
    %783 = vst [vmem:[#allocation16 + $0x18] sm:$0xff] %v717
    %784 = vst [vmem:[#allocation16 + $0x20] sm:$0xff] %v722
    %785 = vst [vmem:[#allocation16 + $0x28] sm:$0xff] %v727
    %786 = vst [vmem:[#allocation16 + $0x30] sm:$0xff] %v732
    %787 = vst [vmem:[#allocation16 + $0x38] sm:$0xff] %v737
    %788 = vst [vmem:[#allocation16 + $0x40] sm:$0xff] %v742
    %789 = vst [vmem:[#allocation16 + $0x48] sm:$0xff] %v747
    %790 = vst [vmem:[#allocation16 + $0x50] sm:$0xff] %v752
    %791 = vst [vmem:[#allocation16 + $0x58] sm:$0xff] %v757
    %792 = vst [vmem:[#allocation16 + $0x60] sm:$0xff] %v762
    %793 = vst [vmem:[#allocation16 + $0x68] sm:$0xff] %v767
    %794 = vst [vmem:[#allocation16 + $0x70] sm:$0xff] %v772
    %795 = vst [vmem:[#allocation16 + $0x78] sm:$0xff] %v777
    // Predicated region
    $region50: #{_lambda_.3} parent=1 // pred_check
      _
    $region51: #{_lambda_.3} parent=1 // pred_check_branch
      %797 = sbr.rel (0) target = $region53
    $region52: #{_lambda_.3} parent=1 // pred_region
      %s799 = ssub.s32 128, 128
      %800 = vsyncadd [#allocation4], %s799
      %s802 = sshll.u32 [#allocation13], 4
      %s803 = int_to_ptr.vmem [resolvable:$true] %s802
      %805 = dma.vmem_to_hbm [thread:$0]  %s803, 128, %s6, [#allocation4]
    $region53: #{_lambda_.3} parent=1 // pred_fallthru
      _
    // Predicated region
    $region54: #{_lambda_.3} parent=1 // pred_check
      _
    $region55: #{_lambda_.3} parent=1 // pred_check_branch
      %807 = sbr.rel (0) target = $region57
    $region56: #{_lambda_.3} parent=1 // pred_region
      %s809 = ssub.s32 512, 512
      %810 = vsyncadd [#allocation15], %s809
      %s811 = sshll.u32 [#allocation14], 4
      %s812 = int_to_ptr.vmem [resolvable:$true] %s811
      %817 = dma.vmem_to_hbm [thread:$0]  %s812, 512, %s7, [#allocation15], 128, 128, 8
    $region57: #{_lambda_.3} parent=1 // pred_fallthru
      _
    // Predicated region
    $region58: #{_lambda_.3} parent=1 // pred_check
      _
    $region59: #{_lambda_.3} parent=1 // pred_check_branch
      %819 = sbr.rel (0) target = $region61
    $region60: #{_lambda_.3} parent=1 // pred_region
      %s821 = ssub.s32 2048, 2048
      %822 = vsyncadd [#allocation15], %s821
      %s823 = sshll.u32 [#allocation16], 4
      %s824 = int_to_ptr.vmem [resolvable:$true] %s823
      %829 = dma.vmem_to_hbm [thread:$0]  %s824, 2048, %s8, [#allocation15], 128, 128, 8
    $region61: #{_lambda_.3} parent=1 // pred_fallthru
      _
    // Predicated region
    $region62: #{_lambda_.3} parent=1 // pred_check
      _
    $region63: #{_lambda_.3} parent=1 // pred_check_branch
      %831 = sbr.rel (0) target = $region65
    $region64: #{_lambda_.3} parent=1 // pred_region
      %832 = dma.done [#allocation4], 128
    $region65: #{_lambda_.3} parent=1 // pred_fallthru
      _
    // Predicated region
    $region66: #{_lambda_.3} parent=1 // pred_check
      _
    $region67: #{_lambda_.3} parent=1 // pred_check_branch
      %834 = sbr.rel (0) target = $region69
    $region68: #{_lambda_.3} parent=1 // pred_region
      %835 = dma.done [#allocation15], 512
    $region69: #{_lambda_.3} parent=1 // pred_fallthru
      _
    // Predicated region
    $region70: #{_lambda_.3} parent=1 // pred_check
      _
    $region71: #{_lambda_.3} parent=1 // pred_check_branch
      %837 = sbr.rel (0) target = $region73
    $region72: #{_lambda_.3} parent=1 // pred_region
      %838 = dma.done [#allocation15], 2048
    $region73: #{_lambda_.3} parent=1 // pred_fallthru
      _
    %839 = vsyncpa [#allocation3], 1
    %840 = vsyncpa [#allocation6], 1
    %841 = vsyncpa [#allocation9], 1
    %842 = vsyncpa [#allocation12], 1
    %843 = vsyncpa [#allocation4], 1
    %844 = vsyncpa [#allocation15], 1

// kernel: _lambda_.2
$region0: #{_lambda_.2}
  #allocation0 [shape = 'u32[]', space=smem, size = 0x4, offset = 0x4, fixed_abs, tag = 'smem constant byte address 0x4 - core index']
  #allocation1 [shape = 'u32[144,128]{1,0:T(1,128)}', space=vmem, size = 0x12000, scoped, tag = 'internal scratch']
  %s0 = inlined_call_operand.hbm [shape: f32[8,512], index: 0, kind: input, shape index: {}]
  %s1 = inlined_call_operand.hbm [shape: f32[512,512], index: 1, kind: input, shape index: {}]
  %s2 = inlined_call_operand.hbm [shape: f32[1,512], index: 2, kind: input, shape index: {}]
  %s3 = inlined_call_operand.hbm [shape: f32[512,512], index: 3, kind: input, shape index: {}]
  %s4 = inlined_call_operand.hbm [shape: f32[1,512], index: 4, kind: input, shape index: {}]
  %s5 = inlined_call_operand.hbm [shape: f32[8,512], index: 5, kind: output, shape index: {}]
  %s6 = sld [smem:[#allocation0]]
  $region50: #{_lambda_.2} parent=0
    _
  %s8 = ssub.s32 1, %s6
  %s9 = scalar_select 0, %s8, %s6
  $region1: #{_lambda_.2} parent=0
    #allocation2 [shape = 'u8[16384]{0}', space=vmem, size = 0x4000, scoped, tag = 'input window, operand 0, single buffered']
    #allocation3 [shape = 's32[1]{0}', space=sflag, size = 0x4, scoped, tag = 'scoped memory for _lambda_.2']
    #allocation4 [shape = 's32[1]{0}', space=sflag, size = 0x4, scoped, tag = 'scoped memory for _lambda_.2']
    #allocation5 [shape = 'u8[1048576]{0}', space=vmem, size = 0x100000, scoped, tag = 'input window, operand 1, single buffered']
    #allocation6 [shape = 's32[1]{0}', space=sflag, size = 0x4, scoped, tag = 'scoped memory for _lambda_.2']
    #allocation7 [shape = 'u8[2048]{0}', space=vmem, size = 0x800, scoped, tag = 'input window, operand 2, single buffered']
    #allocation8 [shape = 'u8[1048576]{0}', space=vmem, size = 0x100000, scoped, tag = 'input window, operand 3, single buffered']
    #allocation9 [shape = 's32[1]{0}', space=sflag, size = 0x4, scoped, tag = 'scoped memory for _lambda_.2']
    #allocation10 [shape = 'u8[2048]{0}', space=vmem, size = 0x800, scoped, tag = 'input window, operand 4, single buffered']
    #allocation11 [shape = 'u8[16384]{0}', space=vmem, size = 0x4000, scoped, tag = 'output window, operand 0, single buffered']
    %10 = vsyncpa [#allocation3], 0
    %11 = vsyncpa [#allocation6], 0
    %12 = vsyncpa [#allocation9], 0
    %13 = vsyncpa [#allocation4], 0
    // Predicated region
    $region2: #{_lambda_.2} parent=1 // pred_check
      _
    $region3: #{_lambda_.2} parent=1 // pred_check_branch
      %15 = sbr.rel (0) target = $region5
    $region4: #{_lambda_.2} parent=1 // pred_region
      %s17 = ssub.s32 512, 512
      %18 = vsyncadd [#allocation3], %s17
      %s20 = sshll.u32 [#allocation2], 4
      %s21 = int_to_ptr.vmem [resolvable:$true] %s20
      %23 = dma.hbm_to_vmem [thread:$0]  %s0, 512, %s21, [#allocation3]
    $region5: #{_lambda_.2} parent=1 // pred_fallthru
      _
    // Predicated region
    $region6: #{_lambda_.2} parent=1 // pred_check
      _
    $region7: #{_lambda_.2} parent=1 // pred_check_branch
      %25 = sbr.rel (0) target = $region9
    $region8: #{_lambda_.2} parent=1 // pred_region
      %s27 = ssub.s32 32768, 32768
      %28 = vsyncadd [#allocation6], %s27
      %s29 = sshll.u32 [#allocation5], 4
      %s30 = int_to_ptr.vmem [resolvable:$true] %s29
      %35 = dma.hbm_to_vmem [thread:$0]  %s1, 32768, %s30, [#allocation6], 512, 512, 32
    $region9: #{_lambda_.2} parent=1 // pred_fallthru
      _
    // Predicated region
    $region10: #{_lambda_.2} parent=1 // pred_check
      _
    $region11: #{_lambda_.2} parent=1 // pred_check_branch
      %37 = sbr.rel (0) target = $region13
    $region12: #{_lambda_.2} parent=1 // pred_region
      %s39 = ssub.s32 64, 64
      %40 = vsyncadd [#allocation6], %s39
      %s42 = sshll.u32 [#allocation7], 4
      %s43 = int_to_ptr.vmem [resolvable:$true] %s42
      %45 = dma.hbm_to_vmem [thread:$0]  %s2, 64, %s43, [#allocation6]
    $region13: #{_lambda_.2} parent=1 // pred_fallthru
      _
    // Predicated region
    $region14: #{_lambda_.2} parent=1 // pred_check
      _
    $region15: #{_lambda_.2} parent=1 // pred_check_branch
      %47 = sbr.rel (0) target = $region17
    $region16: #{_lambda_.2} parent=1 // pred_region
      %s49 = ssub.s32 32768, 32768
      %50 = vsyncadd [#allocation9], %s49
      %s51 = sshll.u32 [#allocation8], 4
      %s52 = int_to_ptr.vmem [resolvable:$true] %s51
      %57 = dma.hbm_to_vmem [thread:$0]  %s3, 32768, %s52, [#allocation9], 512, 512, 32
    $region17: #{_lambda_.2} parent=1 // pred_fallthru
      _
    // Predicated region
    $region18: #{_lambda_.2} parent=1 // pred_check
      _
    $region19: #{_lambda_.2} parent=1 // pred_check_branch
      %59 = sbr.rel (0) target = $region21
    $region20: #{_lambda_.2} parent=1 // pred_region
      %s61 = ssub.s32 64, 64
      %62 = vsyncadd [#allocation9], %s61
      %s64 = sshll.u32 [#allocation10], 4
      %s65 = int_to_ptr.vmem [resolvable:$true] %s64
      %67 = dma.hbm_to_vmem [thread:$0]  %s4, 64, %s65, [#allocation9]
    $region21: #{_lambda_.2} parent=1 // pred_fallthru
      _
    // Predicated region
    $region22: #{_lambda_.2} parent=1 // pred_check
      _
    $region23: #{_lambda_.2} parent=1 // pred_check_branch
      %69 = sbr.rel (0) target = $region25
    $region24: #{_lambda_.2} parent=1 // pred_region
      %70 = dma.done [#allocation3], 512
    $region25: #{_lambda_.2} parent=1 // pred_fallthru
      _
    // Predicated region
    $region26: #{_lambda_.2} parent=1 // pred_check
      _
    $region27: #{_lambda_.2} parent=1 // pred_check_branch
      %72 = sbr.rel (0) target = $region29
    $region28: #{_lambda_.2} parent=1 // pred_region
      %73 = dma.done [#allocation6], 32768
    $region29: #{_lambda_.2} parent=1 // pred_fallthru
      _
    // Predicated region
    $region30: #{_lambda_.2} parent=1 // pred_check
      _
    $region31: #{_lambda_.2} parent=1 // pred_check_branch
      %75 = sbr.rel (0) target = $region33
    $region32: #{_lambda_.2} parent=1 // pred_region
      %76 = dma.done [#allocation6], 64
    $region33: #{_lambda_.2} parent=1 // pred_fallthru
      _
    // Predicated region
    $region34: #{_lambda_.2} parent=1 // pred_check
      _
    $region35: #{_lambda_.2} parent=1 // pred_check_branch
      %78 = sbr.rel (0) target = $region37
    $region36: #{_lambda_.2} parent=1 // pred_region
      %79 = dma.done [#allocation9], 32768
    $region37: #{_lambda_.2} parent=1 // pred_fallthru
      _
    // Predicated region
    $region38: #{_lambda_.2} parent=1 // pred_check
      _
    $region39: #{_lambda_.2} parent=1 // pred_check_branch
      %81 = sbr.rel (0) target = $region41
    $region40: #{_lambda_.2} parent=1 // pred_region
      %82 = dma.done [#allocation9], 64
    $region41: #{_lambda_.2} parent=1 // pred_fallthru
      _
    %v83 = vld [vmem:[#allocation2] sm:$0xff]
    %v84 = vld [vmem:[#allocation2 + $0x8] sm:$0xff]
    %v85 = vld [vmem:[#allocation2 + $0x10] sm:$0xff]
    %v86 = vld [vmem:[#allocation2 + $0x18] sm:$0xff]
    %v87 = vld [vmem:[#allocation5] sm:$0xff]
    %v88 = vld [vmem:[#allocation5 + $0x8] sm:$0xff]
    %v89 = vld [vmem:[#allocation5 + $0x10] sm:$0xff]
    %v90 = vld [vmem:[#allocation5 + $0x18] sm:$0xff]
    %v91 = vld [vmem:[#allocation5 + $0x20] sm:$0xff]
    %v92 = vld [vmem:[#allocation5 + $0x28] sm:$0xff]
    %v93 = vld [vmem:[#allocation5 + $0x30] sm:$0xff]
    %v94 = vld [vmem:[#allocation5 + $0x38] sm:$0xff]
    %v95 = vld [vmem:[#allocation5 + $0x40] sm:$0xff]
    %v96 = vld [vmem:[#allocation5 + $0x48] sm:$0xff]
    %v97 = vld [vmem:[#allocation5 + $0x50] sm:$0xff]
    %v98 = vld [vmem:[#allocation5 + $0x58] sm:$0xff]
    %v99 = vld [vmem:[#allocation5 + $0x60] sm:$0xff]
    %v100 = vld [vmem:[#allocation5 + $0x68] sm:$0xff]
    %v101 = vld [vmem:[#allocation5 + $0x70] sm:$0xff]
    %v102 = vld [vmem:[#allocation5 + $0x78] sm:$0xff]
    %v103 = vld [vmem:[#allocation5 + $0x80] sm:$0xff]
    %v104 = vld [vmem:[#allocation5 + $0x88] sm:$0xff]
    %v105 = vld [vmem:[#allocation5 + $0x90] sm:$0xff]
    %v106 = vld [vmem:[#allocation5 + $0x98] sm:$0xff]
    %v107 = vld [vmem:[#allocation5 + $0xa0] sm:$0xff]
    %v108 = vld [vmem:[#allocation5 + $0xa8] sm:$0xff]
    %v109 = vld [vmem:[#allocation5 + $0xb0] sm:$0xff]
    %v110 = vld [vmem:[#allocation5 + $0xb8] sm:$0xff]
    %v111 = vld [vmem:[#allocation5 + $0xc0] sm:$0xff]
    %v112 = vld [vmem:[#allocation5 + $0xc8] sm:$0xff]
    %v113 = vld [vmem:[#allocation5 + $0xd0] sm:$0xff]
    %v114 = vld [vmem:[#allocation5 + $0xd8] sm:$0xff]
    %v115 = vld [vmem:[#allocation5 + $0xe0] sm:$0xff]
    %v116 = vld [vmem:[#allocation5 + $0xe8] sm:$0xff]
    %v117 = vld [vmem:[#allocation5 + $0xf0] sm:$0xff]
    %v118 = vld [vmem:[#allocation5 + $0xf8] sm:$0xff]
    %v119 = vld [vmem:[#allocation5 + $0x100] sm:$0xff]
    %v120 = vld [vmem:[#allocation5 + $0x108] sm:$0xff]
    %v121 = vld [vmem:[#allocation5 + $0x110] sm:$0xff]
    %v122 = vld [vmem:[#allocation5 + $0x118] sm:$0xff]
    %v123 = vld [vmem:[#allocation5 + $0x120] sm:$0xff]
    %v124 = vld [vmem:[#allocation5 + $0x128] sm:$0xff]
    %v125 = vld [vmem:[#allocation5 + $0x130] sm:$0xff]
    %v126 = vld [vmem:[#allocation5 + $0x138] sm:$0xff]
    %v127 = vld [vmem:[#allocation5 + $0x140] sm:$0xff]
    %v128 = vld [vmem:[#allocation5 + $0x148] sm:$0xff]
    %v129 = vld [vmem:[#allocation5 + $0x150] sm:$0xff]
    %v130 = vld [vmem:[#allocation5 + $0x158] sm:$0xff]
    %v131 = vld [vmem:[#allocation5 + $0x160] sm:$0xff]
    %v132 = vld [vmem:[#allocation5 + $0x168] sm:$0xff]
    %v133 = vld [vmem:[#allocation5 + $0x170] sm:$0xff]
    %v134 = vld [vmem:[#allocation5 + $0x178] sm:$0xff]
    %v135 = vld [vmem:[#allocation5 + $0x180] sm:$0xff]
    %v136 = vld [vmem:[#allocation5 + $0x188] sm:$0xff]
    %v137 = vld [vmem:[#allocation5 + $0x190] sm:$0xff]
    %v138 = vld [vmem:[#allocation5 + $0x198] sm:$0xff]
    %v139 = vld [vmem:[#allocation5 + $0x1a0] sm:$0xff]
    %v140 = vld [vmem:[#allocation5 + $0x1a8] sm:$0xff]
    %v141 = vld [vmem:[#allocation5 + $0x1b0] sm:$0xff]
    %v142 = vld [vmem:[#allocation5 + $0x1b8] sm:$0xff]
    %v143 = vld [vmem:[#allocation5 + $0x1c0] sm:$0xff]
    %v144 = vld [vmem:[#allocation5 + $0x1c8] sm:$0xff]
    %v145 = vld [vmem:[#allocation5 + $0x1d0] sm:$0xff]
    %v146 = vld [vmem:[#allocation5 + $0x1d8] sm:$0xff]
    %v147 = vld [vmem:[#allocation5 + $0x1e0] sm:$0xff]
    %v148 = vld [vmem:[#allocation5 + $0x1e8] sm:$0xff]
    %v149 = vld [vmem:[#allocation5 + $0x1f0] sm:$0xff]
    %v150 = vld [vmem:[#allocation5 + $0x1f8] sm:$0xff]
    %v151 = vld [vmem:[#allocation5 + $0x200] sm:$0xff]
    %v152 = vld [vmem:[#allocation5 + $0x208] sm:$0xff]
    %v153 = vld [vmem:[#allocation5 + $0x210] sm:$0xff]
    %v154 = vld [vmem:[#allocation5 + $0x218] sm:$0xff]
    %v155 = vld [vmem:[#allocation5 + $0x220] sm:$0xff]
    %v156 = vld [vmem:[#allocation5 + $0x228] sm:$0xff]
    %v157 = vld [vmem:[#allocation5 + $0x230] sm:$0xff]
    %v158 = vld [vmem:[#allocation5 + $0x238] sm:$0xff]
    %v159 = vld [vmem:[#allocation5 + $0x240] sm:$0xff]
    %v160 = vld [vmem:[#allocation5 + $0x248] sm:$0xff]
    %v161 = vld [vmem:[#allocation5 + $0x250] sm:$0xff]
    %v162 = vld [vmem:[#allocation5 + $0x258] sm:$0xff]
    %v163 = vld [vmem:[#allocation5 + $0x260] sm:$0xff]
    %v164 = vld [vmem:[#allocation5 + $0x268] sm:$0xff]
    %v165 = vld [vmem:[#allocation5 + $0x270] sm:$0xff]
    %v166 = vld [vmem:[#allocation5 + $0x278] sm:$0xff]
    %v167 = vld [vmem:[#allocation5 + $0x280] sm:$0xff]
    %v168 = vld [vmem:[#allocation5 + $0x288] sm:$0xff]
    %v169 = vld [vmem:[#allocation5 + $0x290] sm:$0xff]
    %v170 = vld [vmem:[#allocation5 + $0x298] sm:$0xff]
    %v171 = vld [vmem:[#allocation5 + $0x2a0] sm:$0xff]
    %v172 = vld [vmem:[#allocation5 + $0x2a8] sm:$0xff]
    %v173 = vld [vmem:[#allocation5 + $0x2b0] sm:$0xff]
    %v174 = vld [vmem:[#allocation5 + $0x2b8] sm:$0xff]
    %v175 = vld [vmem:[#allocation5 + $0x2c0] sm:$0xff]
    %v176 = vld [vmem:[#allocation5 + $0x2c8] sm:$0xff]
    %v177 = vld [vmem:[#allocation5 + $0x2d0] sm:$0xff]
    %v178 = vld [vmem:[#allocation5 + $0x2d8] sm:$0xff]
    %v179 = vld [vmem:[#allocation5 + $0x2e0] sm:$0xff]
    %v180 = vld [vmem:[#allocation5 + $0x2e8] sm:$0xff]
    %v181 = vld [vmem:[#allocation5 + $0x2f0] sm:$0xff]
    %v182 = vld [vmem:[#allocation5 + $0x2f8] sm:$0xff]
    %v183 = vld [vmem:[#allocation5 + $0x300] sm:$0xff]
    %v184 = vld [vmem:[#allocation5 + $0x308] sm:$0xff]
    %v185 = vld [vmem:[#allocation5 + $0x310] sm:$0xff]
    %v186 = vld [vmem:[#allocation5 + $0x318] sm:$0xff]
    %v187 = vld [vmem:[#allocation5 + $0x320] sm:$0xff]
    %v188 = vld [vmem:[#allocation5 + $0x328] sm:$0xff]
    %v189 = vld [vmem:[#allocation5 + $0x330] sm:$0xff]
    %v190 = vld [vmem:[#allocation5 + $0x338] sm:$0xff]
    %v191 = vld [vmem:[#allocation5 + $0x340] sm:$0xff]
    %v192 = vld [vmem:[#allocation5 + $0x348] sm:$0xff]
    %v193 = vld [vmem:[#allocation5 + $0x350] sm:$0xff]
    %v194 = vld [vmem:[#allocation5 + $0x358] sm:$0xff]
    %v195 = vld [vmem:[#allocation5 + $0x360] sm:$0xff]
    %v196 = vld [vmem:[#allocation5 + $0x368] sm:$0xff]
    %v197 = vld [vmem:[#allocation5 + $0x370] sm:$0xff]
    %v198 = vld [vmem:[#allocation5 + $0x378] sm:$0xff]
    %v199 = vld [vmem:[#allocation5 + $0x380] sm:$0xff]
    %v200 = vld [vmem:[#allocation5 + $0x388] sm:$0xff]
    %v201 = vld [vmem:[#allocation5 + $0x390] sm:$0xff]
    %v202 = vld [vmem:[#allocation5 + $0x398] sm:$0xff]
    %v203 = vld [vmem:[#allocation5 + $0x3a0] sm:$0xff]
    %v204 = vld [vmem:[#allocation5 + $0x3a8] sm:$0xff]
    %v205 = vld [vmem:[#allocation5 + $0x3b0] sm:$0xff]
    %v206 = vld [vmem:[#allocation5 + $0x3b8] sm:$0xff]
    %v207 = vld [vmem:[#allocation5 + $0x3c0] sm:$0xff]
    %v208 = vld [vmem:[#allocation5 + $0x3c8] sm:$0xff]
    %v209 = vld [vmem:[#allocation5 + $0x3d0] sm:$0xff]
    %v210 = vld [vmem:[#allocation5 + $0x3d8] sm:$0xff]
    %v211 = vld [vmem:[#allocation5 + $0x3e0] sm:$0xff]
    %v212 = vld [vmem:[#allocation5 + $0x3e8] sm:$0xff]
    %v213 = vld [vmem:[#allocation5 + $0x3f0] sm:$0xff]
    %v214 = vld [vmem:[#allocation5 + $0x3f8] sm:$0xff]
    %v215 = vld [vmem:[#allocation5 + $0x400] sm:$0xff]
    %v216 = vld [vmem:[#allocation5 + $0x408] sm:$0xff]
    %v217 = vld [vmem:[#allocation5 + $0x410] sm:$0xff]
    %v218 = vld [vmem:[#allocation5 + $0x418] sm:$0xff]
    %v219 = vld [vmem:[#allocation5 + $0x420] sm:$0xff]
    %v220 = vld [vmem:[#allocation5 + $0x428] sm:$0xff]
    %v221 = vld [vmem:[#allocation5 + $0x430] sm:$0xff]
    %v222 = vld [vmem:[#allocation5 + $0x438] sm:$0xff]
    %v223 = vld [vmem:[#allocation5 + $0x440] sm:$0xff]
    %v224 = vld [vmem:[#allocation5 + $0x448] sm:$0xff]
    %v225 = vld [vmem:[#allocation5 + $0x450] sm:$0xff]
    %v226 = vld [vmem:[#allocation5 + $0x458] sm:$0xff]
    %v227 = vld [vmem:[#allocation5 + $0x460] sm:$0xff]
    %v228 = vld [vmem:[#allocation5 + $0x468] sm:$0xff]
    %v229 = vld [vmem:[#allocation5 + $0x470] sm:$0xff]
    %v230 = vld [vmem:[#allocation5 + $0x478] sm:$0xff]
    %v231 = vld [vmem:[#allocation5 + $0x480] sm:$0xff]
    %v232 = vld [vmem:[#allocation5 + $0x488] sm:$0xff]
    %v233 = vld [vmem:[#allocation5 + $0x490] sm:$0xff]
    %v234 = vld [vmem:[#allocation5 + $0x498] sm:$0xff]
    %v235 = vld [vmem:[#allocation5 + $0x4a0] sm:$0xff]
    %v236 = vld [vmem:[#allocation5 + $0x4a8] sm:$0xff]
    %v237 = vld [vmem:[#allocation5 + $0x4b0] sm:$0xff]
    %v238 = vld [vmem:[#allocation5 + $0x4b8] sm:$0xff]
    %v239 = vld [vmem:[#allocation5 + $0x4c0] sm:$0xff]
    %v240 = vld [vmem:[#allocation5 + $0x4c8] sm:$0xff]
    %v241 = vld [vmem:[#allocation5 + $0x4d0] sm:$0xff]
    %v242 = vld [vmem:[#allocation5 + $0x4d8] sm:$0xff]
    %v243 = vld [vmem:[#allocation5 + $0x4e0] sm:$0xff]
    %v244 = vld [vmem:[#allocation5 + $0x4e8] sm:$0xff]
    %v245 = vld [vmem:[#allocation5 + $0x4f0] sm:$0xff]
    %v246 = vld [vmem:[#allocation5 + $0x4f8] sm:$0xff]
    %v247 = vld [vmem:[#allocation5 + $0x500] sm:$0xff]
    %v248 = vld [vmem:[#allocation5 + $0x508] sm:$0xff]
    %v249 = vld [vmem:[#allocation5 + $0x510] sm:$0xff]
    %v250 = vld [vmem:[#allocation5 + $0x518] sm:$0xff]
    %v251 = vld [vmem:[#allocation5 + $0x520] sm:$0xff]
    %v252 = vld [vmem:[#allocation5 + $0x528] sm:$0xff]
    %v253 = vld [vmem:[#allocation5 + $0x530] sm:$0xff]
    %v254 = vld [vmem:[#allocation5 + $0x538] sm:$0xff]
    %v255 = vld [vmem:[#allocation5 + $0x540] sm:$0xff]
    %v256 = vld [vmem:[#allocation5 + $0x548] sm:$0xff]
    %v257 = vld [vmem:[#allocation5 + $0x550] sm:$0xff]
    %v258 = vld [vmem:[#allocation5 + $0x558] sm:$0xff]
    %v259 = vld [vmem:[#allocation5 + $0x560] sm:$0xff]
    %v260 = vld [vmem:[#allocation5 + $0x568] sm:$0xff]
    %v261 = vld [vmem:[#allocation5 + $0x570] sm:$0xff]
    %v262 = vld [vmem:[#allocation5 + $0x578] sm:$0xff]
    %v263 = vld [vmem:[#allocation5 + $0x580] sm:$0xff]
    %v264 = vld [vmem:[#allocation5 + $0x588] sm:$0xff]
    %v265 = vld [vmem:[#allocation5 + $0x590] sm:$0xff]
    %v266 = vld [vmem:[#allocation5 + $0x598] sm:$0xff]
    %v267 = vld [vmem:[#allocation5 + $0x5a0] sm:$0xff]
    %v268 = vld [vmem:[#allocation5 + $0x5a8] sm:$0xff]
    %v269 = vld [vmem:[#allocation5 + $0x5b0] sm:$0xff]
    %v270 = vld [vmem:[#allocation5 + $0x5b8] sm:$0xff]
    %v271 = vld [vmem:[#allocation5 + $0x5c0] sm:$0xff]
    %v272 = vld [vmem:[#allocation5 + $0x5c8] sm:$0xff]
    %v273 = vld [vmem:[#allocation5 + $0x5d0] sm:$0xff]
    %v274 = vld [vmem:[#allocation5 + $0x5d8] sm:$0xff]
    %v275 = vld [vmem:[#allocation5 + $0x5e0] sm:$0xff]
    %v276 = vld [vmem:[#allocation5 + $0x5e8] sm:$0xff]
    %v277 = vld [vmem:[#allocation5 + $0x5f0] sm:$0xff]
    %v278 = vld [vmem:[#allocation5 + $0x5f8] sm:$0xff]
    %v279 = vld [vmem:[#allocation5 + $0x600] sm:$0xff]
    %v280 = vld [vmem:[#allocation5 + $0x608] sm:$0xff]
    %v281 = vld [vmem:[#allocation5 + $0x610] sm:$0xff]
    %v282 = vld [vmem:[#allocation5 + $0x618] sm:$0xff]
    %v283 = vld [vmem:[#allocation5 + $0x620] sm:$0xff]
    %v284 = vld [vmem:[#allocation5 + $0x628] sm:$0xff]
    %v285 = vld [vmem:[#allocation5 + $0x630] sm:$0xff]
    %v286 = vld [vmem:[#allocation5 + $0x638] sm:$0xff]
    %v287 = vld [vmem:[#allocation5 + $0x640] sm:$0xff]
    %v288 = vld [vmem:[#allocation5 + $0x648] sm:$0xff]
    %v289 = vld [vmem:[#allocation5 + $0x650] sm:$0xff]
    %v290 = vld [vmem:[#allocation5 + $0x658] sm:$0xff]
    %v291 = vld [vmem:[#allocation5 + $0x660] sm:$0xff]
    %v292 = vld [vmem:[#allocation5 + $0x668] sm:$0xff]
    %v293 = vld [vmem:[#allocation5 + $0x670] sm:$0xff]
    %v294 = vld [vmem:[#allocation5 + $0x678] sm:$0xff]
    %v295 = vld [vmem:[#allocation5 + $0x680] sm:$0xff]
    %v296 = vld [vmem:[#allocation5 + $0x688] sm:$0xff]
    %v297 = vld [vmem:[#allocation5 + $0x690] sm:$0xff]
    %v298 = vld [vmem:[#allocation5 + $0x698] sm:$0xff]
    %v299 = vld [vmem:[#allocation5 + $0x6a0] sm:$0xff]
    %v300 = vld [vmem:[#allocation5 + $0x6a8] sm:$0xff]
    %v301 = vld [vmem:[#allocation5 + $0x6b0] sm:$0xff]
    %v302 = vld [vmem:[#allocation5 + $0x6b8] sm:$0xff]
    %v303 = vld [vmem:[#allocation5 + $0x6c0] sm:$0xff]
    %v304 = vld [vmem:[#allocation5 + $0x6c8] sm:$0xff]
    %v305 = vld [vmem:[#allocation5 + $0x6d0] sm:$0xff]
    %v306 = vld [vmem:[#allocation5 + $0x6d8] sm:$0xff]
    %v307 = vld [vmem:[#allocation5 + $0x6e0] sm:$0xff]
    %v308 = vld [vmem:[#allocation5 + $0x6e8] sm:$0xff]
    %v309 = vld [vmem:[#allocation5 + $0x6f0] sm:$0xff]
    %v310 = vld [vmem:[#allocation5 + $0x6f8] sm:$0xff]
    %v311 = vld [vmem:[#allocation5 + $0x700] sm:$0xff]
    %v312 = vld [vmem:[#allocation5 + $0x708] sm:$0xff]
    %v313 = vld [vmem:[#allocation5 + $0x710] sm:$0xff]
    %v314 = vld [vmem:[#allocation5 + $0x718] sm:$0xff]
    %v315 = vld [vmem:[#allocation5 + $0x720] sm:$0xff]
    %v316 = vld [vmem:[#allocation5 + $0x728] sm:$0xff]
    %v317 = vld [vmem:[#allocation5 + $0x730] sm:$0xff]
    %v318 = vld [vmem:[#allocation5 + $0x738] sm:$0xff]
    %v319 = vld [vmem:[#allocation5 + $0x740] sm:$0xff]
    %v320 = vld [vmem:[#allocation5 + $0x748] sm:$0xff]
    %v321 = vld [vmem:[#allocation5 + $0x750] sm:$0xff]
    %v322 = vld [vmem:[#allocation5 + $0x758] sm:$0xff]
    %v323 = vld [vmem:[#allocation5 + $0x760] sm:$0xff]
    %v324 = vld [vmem:[#allocation5 + $0x768] sm:$0xff]
    %v325 = vld [vmem:[#allocation5 + $0x770] sm:$0xff]
    %v326 = vld [vmem:[#allocation5 + $0x778] sm:$0xff]
    %v327 = vld [vmem:[#allocation5 + $0x780] sm:$0xff]
    %v328 = vld [vmem:[#allocation5 + $0x788] sm:$0xff]
    %v329 = vld [vmem:[#allocation5 + $0x790] sm:$0xff]
    %v330 = vld [vmem:[#allocation5 + $0x798] sm:$0xff]
    %v331 = vld [vmem:[#allocation5 + $0x7a0] sm:$0xff]
    %v332 = vld [vmem:[#allocation5 + $0x7a8] sm:$0xff]
    %v333 = vld [vmem:[#allocation5 + $0x7b0] sm:$0xff]
    %v334 = vld [vmem:[#allocation5 + $0x7b8] sm:$0xff]
    %v335 = vld [vmem:[#allocation5 + $0x7c0] sm:$0xff]
    %v336 = vld [vmem:[#allocation5 + $0x7c8] sm:$0xff]
    %v337 = vld [vmem:[#allocation5 + $0x7d0] sm:$0xff]
    %v338 = vld [vmem:[#allocation5 + $0x7d8] sm:$0xff]
    %v339 = vld [vmem:[#allocation5 + $0x7e0] sm:$0xff]
    %v340 = vld [vmem:[#allocation5 + $0x7e8] sm:$0xff]
    %v341 = vld [vmem:[#allocation5 + $0x7f0] sm:$0xff]
    %v342 = vld [vmem:[#allocation5 + $0x7f8] sm:$0xff]
    %v343 = vld [vmem:[#allocation7] sm:$0xf]
    %v345 = vlaneseq
    %v346 = vshrl.u32 %v345, 7
    %v347 = vsub.s32 0, %v346
    %v348 = vrot.slane %v343, %v347
    %v349 = vlaneseq
    %v350 = vshrl.u32 %v349, 7
    %v351 = vsub.s32 1, %v350
    %v352 = vrot.slane %v343, %v351
    %v353 = vlaneseq
    %v354 = vshrl.u32 %v353, 7
    %v355 = vsub.s32 2, %v354
    %v356 = vrot.slane %v343, %v355
    %v357 = vlaneseq
    %v358 = vshrl.u32 %v357, 7
    %v359 = vsub.s32 3, %v358
    %v360 = vrot.slane %v343, %v359
    %365 = vmatprep.subr.mxu0 %v88
    %366 = vmatpush1.msra.mxu0 %v87
    %367 = vmatprep.subr.mxu0 %v92
    %368 = vmatpush1.msra.mxu0 %v91
    %369 = vmatprep.subr.mxu0 %v96
    %370 = vmatpush1.msra.mxu0 %v95
    %371 = vmatprep.subr.mxu0 %v100
    %372 = vmatpush1.msra.mxu0 %v99
    %373 = vmatprep.subr.mxu0 %v104
    %374 = vmatpush1.msra.mxu0 %v103
    %375 = vmatprep.subr.mxu0 %v108
    %376 = vmatpush1.msra.mxu0 %v107
    %377 = vmatprep.subr.mxu0 %v112
    %378 = vmatpush1.msra.mxu0 %v111
    %379 = vmatprep.subr.mxu0 %v116
    %380 = vmatpush1.msra.mxu0 %v115
    %381 = vmatprep.subr.mxu0 %v120
    %382 = vmatpush1.msra.mxu0 %v119
    %383 = vmatprep.subr.mxu0 %v124
    %384 = vmatpush1.msra.mxu0 %v123
    %385 = vmatprep.subr.mxu0 %v128
    %386 = vmatpush1.msra.mxu0 %v127
    %387 = vmatprep.subr.mxu0 %v132
    %388 = vmatpush1.msra.mxu0 %v131
    %389 = vmatprep.subr.mxu0 %v136
    %390 = vmatpush1.msra.mxu0 %v135
    %391 = vmatprep.subr.mxu0 %v140
    %392 = vmatpush1.msra.mxu0 %v139
    %393 = vmatprep.subr.mxu0 %v144
    %394 = vmatpush1.msra.mxu0 %v143
    %395 = vmatprep.subr.mxu0 %v148
    %396 = vmatpush1.msra.mxu0 %v147
    %397 = vmatprep.subr.mxu0 %v152
    %398 = vmatpush1.msra.mxu0 %v151
    %399 = vmatprep.subr.mxu0 %v156
    %400 = vmatpush1.msra.mxu0 %v155
    %401 = vmatprep.subr.mxu0 %v160
    %402 = vmatpush1.msra.mxu0 %v159
    %403 = vmatprep.subr.mxu0 %v164
    %404 = vmatpush1.msra.mxu0 %v163
    %405 = vmatprep.subr.mxu0 %v168
    %406 = vmatpush1.msra.mxu0 %v167
    %407 = vmatprep.subr.mxu0 %v172
    %408 = vmatpush1.msra.mxu0 %v171
    %409 = vmatprep.subr.mxu0 %v176
    %410 = vmatpush1.msra.mxu0 %v175
    %411 = vmatprep.subr.mxu0 %v180
    %412 = vmatpush1.msra.mxu0 %v179
    %413 = vmatprep.subr.mxu0 %v184
    %414 = vmatpush1.msra.mxu0 %v183
    %415 = vmatprep.subr.mxu0 %v188
    %416 = vmatpush1.msra.mxu0 %v187
    %417 = vmatprep.subr.mxu0 %v192
    %418 = vmatpush1.msra.mxu0 %v191
    %419 = vmatprep.subr.mxu0 %v196
    %420 = vmatpush1.msra.mxu0 %v195
    %421 = vmatprep.subr.mxu0 %v200
    %422 = vmatpush1.msra.mxu0 %v199
    %423 = vmatprep.subr.mxu0 %v204
    %424 = vmatpush1.msra.mxu0 %v203
    %425 = vmatprep.subr.mxu0 %v208
    %426 = vmatpush1.msra.mxu0 %v207
    %427 = vmatprep.subr.mxu0 %v212
    %428 = vmatpush1.msra.mxu0 %v211
    %429 = vmatprep.mubr.f32.mxu0 %v84
    %430 = vmatmul.mubr.f32.gmra.mrb[0].mxu0 %v83
    %v431 = vpop.f32.mrb[0].mxu0
    %v432 = vadd.f32 %v348, %v431
    %v433 = vpop.f32.mrb[0].mxu0
    %v434 = vadd.f32 %v352, %v433
    %435 = vdwg.mxu0
    %436 = vmatprep.subr.mxu0 %v216
    %437 = vmatpush1.msra.mxu0 %v215
    %438 = vmatprep.subr.mxu0 %v220
    %439 = vmatpush1.msra.mxu0 %v219
    %440 = vmatprep.subr.mxu0 %v224
    %441 = vmatpush1.msra.mxu0 %v223
    %442 = vmatprep.subr.mxu0 %v228
    %443 = vmatpush1.msra.mxu0 %v227
    %444 = vmatprep.subr.mxu0 %v232
    %445 = vmatpush1.msra.mxu0 %v231
    %446 = vmatprep.subr.mxu0 %v236
    %447 = vmatpush1.msra.mxu0 %v235
    %448 = vmatprep.subr.mxu0 %v240
    %449 = vmatpush1.msra.mxu0 %v239
    %450 = vmatprep.subr.mxu0 %v244
    %451 = vmatpush1.msra.mxu0 %v243
    %452 = vmatprep.subr.mxu0 %v248
    %453 = vmatpush1.msra.mxu0 %v247
    %454 = vmatprep.subr.mxu0 %v252
    %455 = vmatpush1.msra.mxu0 %v251
    %456 = vmatprep.subr.mxu0 %v256
    %457 = vmatpush1.msra.mxu0 %v255
    %458 = vmatprep.subr.mxu0 %v260
    %459 = vmatpush1.msra.mxu0 %v259
    %460 = vmatprep.subr.mxu0 %v264
    %461 = vmatpush1.msra.mxu0 %v263
    %462 = vmatprep.subr.mxu0 %v268
    %463 = vmatpush1.msra.mxu0 %v267
    %464 = vmatprep.subr.mxu0 %v272
    %465 = vmatpush1.msra.mxu0 %v271
    %466 = vmatprep.subr.mxu0 %v276
    %467 = vmatpush1.msra.mxu0 %v275
    %468 = vmatprep.subr.mxu0 %v280
    %469 = vmatpush1.msra.mxu0 %v279
    %470 = vmatprep.subr.mxu0 %v284
    %471 = vmatpush1.msra.mxu0 %v283
    %472 = vmatprep.subr.mxu0 %v288
    %473 = vmatpush1.msra.mxu0 %v287
    %474 = vmatprep.subr.mxu0 %v292
    %475 = vmatpush1.msra.mxu0 %v291
    %476 = vmatprep.subr.mxu0 %v296
    %477 = vmatpush1.msra.mxu0 %v295
    %478 = vmatprep.subr.mxu0 %v300
    %479 = vmatpush1.msra.mxu0 %v299
    %480 = vmatprep.subr.mxu0 %v304
    %481 = vmatpush1.msra.mxu0 %v303
    %482 = vmatprep.subr.mxu0 %v308
    %483 = vmatpush1.msra.mxu0 %v307
    %484 = vmatprep.subr.mxu0 %v312
    %485 = vmatpush1.msra.mxu0 %v311
    %486 = vmatprep.subr.mxu0 %v316
    %487 = vmatpush1.msra.mxu0 %v315
    %488 = vmatprep.subr.mxu0 %v320
    %489 = vmatpush1.msra.mxu0 %v319
    %490 = vmatprep.subr.mxu0 %v324
    %491 = vmatpush1.msra.mxu0 %v323
    %492 = vmatprep.subr.mxu0 %v328
    %493 = vmatpush1.msra.mxu0 %v327
    %494 = vmatprep.subr.mxu0 %v332
    %495 = vmatpush1.msra.mxu0 %v331
    %496 = vmatprep.subr.mxu0 %v336
    %497 = vmatpush1.msra.mxu0 %v335
    %498 = vmatprep.subr.mxu0 %v340
    %499 = vmatpush1.msra.mxu0 %v339
    %500 = vmatprep.mubr.f32.mxu0 %v86
    %501 = vmatmul.mubr.f32.gmra.mrb[0].mxu0 %v85
    %v502 = vpop.f32.mrb[0].mxu0
    %v503 = vadd.f32 %v432, %v502
    %v504 = vpop.f32.mrb[0].mxu0
    %v505 = vadd.f32 %v434, %v504
    %506 = vdwg.mxu0
    %507 = vmatprep.subr.mxu0 %v90
    %508 = vmatpush1.msra.mxu0 %v89
    %509 = vmatprep.subr.mxu0 %v94
    %510 = vmatpush1.msra.mxu0 %v93
    %511 = vmatprep.subr.mxu0 %v98
    %512 = vmatpush1.msra.mxu0 %v97
    %513 = vmatprep.subr.mxu0 %v102
    %514 = vmatpush1.msra.mxu0 %v101
    %515 = vmatprep.subr.mxu0 %v106
    %516 = vmatpush1.msra.mxu0 %v105
    %517 = vmatprep.subr.mxu0 %v110
    %518 = vmatpush1.msra.mxu0 %v109
    %519 = vmatprep.subr.mxu0 %v114
    %520 = vmatpush1.msra.mxu0 %v113
    %521 = vmatprep.subr.mxu0 %v118
    %522 = vmatpush1.msra.mxu0 %v117
    %523 = vmatprep.subr.mxu0 %v122
    %524 = vmatpush1.msra.mxu0 %v121
    %525 = vmatprep.subr.mxu0 %v126
    %526 = vmatpush1.msra.mxu0 %v125
    %527 = vmatprep.subr.mxu0 %v130
    %528 = vmatpush1.msra.mxu0 %v129
    %529 = vmatprep.subr.mxu0 %v134
    %530 = vmatpush1.msra.mxu0 %v133
    %531 = vmatprep.subr.mxu0 %v138
    %532 = vmatpush1.msra.mxu0 %v137
    %533 = vmatprep.subr.mxu0 %v142
    %534 = vmatpush1.msra.mxu0 %v141
    %535 = vmatprep.subr.mxu0 %v146
    %536 = vmatpush1.msra.mxu0 %v145
    %537 = vmatprep.subr.mxu0 %v150
    %538 = vmatpush1.msra.mxu0 %v149
    %539 = vmatprep.subr.mxu0 %v154
    %540 = vmatpush1.msra.mxu0 %v153
    %541 = vmatprep.subr.mxu0 %v158
    %542 = vmatpush1.msra.mxu0 %v157
    %543 = vmatprep.subr.mxu0 %v162
    %544 = vmatpush1.msra.mxu0 %v161
    %545 = vmatprep.subr.mxu0 %v166
    %546 = vmatpush1.msra.mxu0 %v165
    %547 = vmatprep.subr.mxu0 %v170
    %548 = vmatpush1.msra.mxu0 %v169
    %549 = vmatprep.subr.mxu0 %v174
    %550 = vmatpush1.msra.mxu0 %v173
    %551 = vmatprep.subr.mxu0 %v178
    %552 = vmatpush1.msra.mxu0 %v177
    %553 = vmatprep.subr.mxu0 %v182
    %554 = vmatpush1.msra.mxu0 %v181
    %555 = vmatprep.subr.mxu0 %v186
    %556 = vmatpush1.msra.mxu0 %v185
    %557 = vmatprep.subr.mxu0 %v190
    %558 = vmatpush1.msra.mxu0 %v189
    %559 = vmatprep.subr.mxu0 %v194
    %560 = vmatpush1.msra.mxu0 %v193
    %561 = vmatprep.subr.mxu0 %v198
    %562 = vmatpush1.msra.mxu0 %v197
    %563 = vmatprep.subr.mxu0 %v202
    %564 = vmatpush1.msra.mxu0 %v201
    %565 = vmatprep.subr.mxu0 %v206
    %566 = vmatpush1.msra.mxu0 %v205
    %567 = vmatprep.subr.mxu0 %v210
    %568 = vmatpush1.msra.mxu0 %v209
    %569 = vmatprep.subr.mxu0 %v214
    %570 = vmatpush1.msra.mxu0 %v213
    %571 = vmatprep.mubr.f32.mxu0 %v84
    %572 = vmatmul.mubr.f32.gmra.mrb[0].mxu0 %v83
    %v573 = vpop.f32.mrb[0].mxu0
    %v574 = vadd.f32 %v356, %v573
    %v575 = vpop.f32.mrb[0].mxu0
    %v576 = vadd.f32 %v360, %v575
    %577 = vdwg.mxu0
    %578 = vmatprep.subr.mxu0 %v218
    %579 = vmatpush1.msra.mxu0 %v217
    %580 = vmatprep.subr.mxu0 %v222
    %581 = vmatpush1.msra.mxu0 %v221
    %582 = vmatprep.subr.mxu0 %v226
    %583 = vmatpush1.msra.mxu0 %v225
    %584 = vmatprep.subr.mxu0 %v230
    %585 = vmatpush1.msra.mxu0 %v229
    %586 = vmatprep.subr.mxu0 %v234
    %587 = vmatpush1.msra.mxu0 %v233
    %588 = vmatprep.subr.mxu0 %v238
    %589 = vmatpush1.msra.mxu0 %v237
    %590 = vmatprep.subr.mxu0 %v242
    %591 = vmatpush1.msra.mxu0 %v241
    %592 = vmatprep.subr.mxu0 %v246
    %593 = vmatpush1.msra.mxu0 %v245
    %594 = vmatprep.subr.mxu0 %v250
    %595 = vmatpush1.msra.mxu0 %v249
    %596 = vmatprep.subr.mxu0 %v254
    %597 = vmatpush1.msra.mxu0 %v253
    %598 = vmatprep.subr.mxu0 %v258
    %599 = vmatpush1.msra.mxu0 %v257
    %600 = vmatprep.subr.mxu0 %v262
    %601 = vmatpush1.msra.mxu0 %v261
    %602 = vmatprep.subr.mxu0 %v266
    %603 = vmatpush1.msra.mxu0 %v265
    %604 = vmatprep.subr.mxu0 %v270
    %605 = vmatpush1.msra.mxu0 %v269
    %606 = vmatprep.subr.mxu0 %v274
    %607 = vmatpush1.msra.mxu0 %v273
    %608 = vmatprep.subr.mxu0 %v278
    %609 = vmatpush1.msra.mxu0 %v277
    %610 = vmatprep.subr.mxu0 %v282
    %611 = vmatpush1.msra.mxu0 %v281
    %612 = vmatprep.subr.mxu0 %v286
    %613 = vmatpush1.msra.mxu0 %v285
    %614 = vmatprep.subr.mxu0 %v290
    %615 = vmatpush1.msra.mxu0 %v289
    %616 = vmatprep.subr.mxu0 %v294
    %617 = vmatpush1.msra.mxu0 %v293
    %618 = vmatprep.subr.mxu0 %v298
    %619 = vmatpush1.msra.mxu0 %v297
    %620 = vmatprep.subr.mxu0 %v302
    %621 = vmatpush1.msra.mxu0 %v301
    %622 = vmatprep.subr.mxu0 %v306
    %623 = vmatpush1.msra.mxu0 %v305
    %624 = vmatprep.subr.mxu0 %v310
    %625 = vmatpush1.msra.mxu0 %v309
    %626 = vmatprep.subr.mxu0 %v314
    %627 = vmatpush1.msra.mxu0 %v313
    %628 = vmatprep.subr.mxu0 %v318
    %629 = vmatpush1.msra.mxu0 %v317
    %630 = vmatprep.subr.mxu0 %v322
    %631 = vmatpush1.msra.mxu0 %v321
    %632 = vmatprep.subr.mxu0 %v326
    %633 = vmatpush1.msra.mxu0 %v325
    %634 = vmatprep.subr.mxu0 %v330
    %635 = vmatpush1.msra.mxu0 %v329
    %636 = vmatprep.subr.mxu0 %v334
    %637 = vmatpush1.msra.mxu0 %v333
    %638 = vmatprep.subr.mxu0 %v338
    %639 = vmatpush1.msra.mxu0 %v337
    %640 = vmatprep.subr.mxu0 %v342
    %641 = vmatpush1.msra.mxu0 %v341
    %642 = vmatprep.mubr.f32.mxu0 %v86
    %643 = vmatmul.mubr.f32.gmra.mrb[0].mxu0 %v85
    %v644 = vpop.f32.mrb[0].mxu0
    %v645 = vadd.f32 %v574, %v644
    %v646 = vpop.f32.mrb[0].mxu0
    %v647 = vadd.f32 %v576, %v646
    %648 = vdwg.mxu0
    %v649 = vmax.f32 %v503, 0.0
    %v650 = vmax.f32 %v505, 0.0
    %v651 = vmax.f32 %v645, 0.0
    %v652 = vmax.f32 %v647, 0.0
    %v653 = vld [vmem:[#allocation8] sm:$0xff]
    %v654 = vld [vmem:[#allocation8 + $0x8] sm:$0xff]
    %v655 = vld [vmem:[#allocation8 + $0x10] sm:$0xff]
    %v656 = vld [vmem:[#allocation8 + $0x18] sm:$0xff]
    %v657 = vld [vmem:[#allocation8 + $0x20] sm:$0xff]
    %v658 = vld [vmem:[#allocation8 + $0x28] sm:$0xff]
    %v659 = vld [vmem:[#allocation8 + $0x30] sm:$0xff]
    %v660 = vld [vmem:[#allocation8 + $0x38] sm:$0xff]
    %v661 = vld [vmem:[#allocation8 + $0x40] sm:$0xff]
    %v662 = vld [vmem:[#allocation8 + $0x48] sm:$0xff]
    %v663 = vld [vmem:[#allocation8 + $0x50] sm:$0xff]
    %v664 = vld [vmem:[#allocation8 + $0x58] sm:$0xff]
    %v665 = vld [vmem:[#allocation8 + $0x60] sm:$0xff]
    %v666 = vld [vmem:[#allocation8 + $0x68] sm:$0xff]
    %v667 = vld [vmem:[#allocation8 + $0x70] sm:$0xff]
    %v668 = vld [vmem:[#allocation8 + $0x78] sm:$0xff]
    %v669 = vld [vmem:[#allocation8 + $0x80] sm:$0xff]
    %v670 = vld [vmem:[#allocation8 + $0x88] sm:$0xff]
    %v671 = vld [vmem:[#allocation8 + $0x90] sm:$0xff]
    %v672 = vld [vmem:[#allocation8 + $0x98] sm:$0xff]
    %v673 = vld [vmem:[#allocation8 + $0xa0] sm:$0xff]
    %v674 = vld [vmem:[#allocation8 + $0xa8] sm:$0xff]
    %v675 = vld [vmem:[#allocation8 + $0xb0] sm:$0xff]
    %v676 = vld [vmem:[#allocation8 + $0xb8] sm:$0xff]
    %v677 = vld [vmem:[#allocation8 + $0xc0] sm:$0xff]
    %v678 = vld [vmem:[#allocation8 + $0xc8] sm:$0xff]
    %v679 = vld [vmem:[#allocation8 + $0xd0] sm:$0xff]
    %v680 = vld [vmem:[#allocation8 + $0xd8] sm:$0xff]
    %v681 = vld [vmem:[#allocation8 + $0xe0] sm:$0xff]
    %v682 = vld [vmem:[#allocation8 + $0xe8] sm:$0xff]
    %v683 = vld [vmem:[#allocation8 + $0xf0] sm:$0xff]
    %v684 = vld [vmem:[#allocation8 + $0xf8] sm:$0xff]
    %v685 = vld [vmem:[#allocation8 + $0x100] sm:$0xff]
    %v686 = vld [vmem:[#allocation8 + $0x108] sm:$0xff]
    %v687 = vld [vmem:[#allocation8 + $0x110] sm:$0xff]
    %v688 = vld [vmem:[#allocation8 + $0x118] sm:$0xff]
    %v689 = vld [vmem:[#allocation8 + $0x120] sm:$0xff]
    %v690 = vld [vmem:[#allocation8 + $0x128] sm:$0xff]
    %v691 = vld [vmem:[#allocation8 + $0x130] sm:$0xff]
    %v692 = vld [vmem:[#allocation8 + $0x138] sm:$0xff]
    %v693 = vld [vmem:[#allocation8 + $0x140] sm:$0xff]
    %v694 = vld [vmem:[#allocation8 + $0x148] sm:$0xff]
    %v695 = vld [vmem:[#allocation8 + $0x150] sm:$0xff]
    %v696 = vld [vmem:[#allocation8 + $0x158] sm:$0xff]
    %v697 = vld [vmem:[#allocation8 + $0x160] sm:$0xff]
    %v698 = vld [vmem:[#allocation8 + $0x168] sm:$0xff]
    %v699 = vld [vmem:[#allocation8 + $0x170] sm:$0xff]
    %v700 = vld [vmem:[#allocation8 + $0x178] sm:$0xff]
    %v701 = vld [vmem:[#allocation8 + $0x180] sm:$0xff]
    %v702 = vld [vmem:[#allocation8 + $0x188] sm:$0xff]
    %v703 = vld [vmem:[#allocation8 + $0x190] sm:$0xff]
    %v704 = vld [vmem:[#allocation8 + $0x198] sm:$0xff]
    %v705 = vld [vmem:[#allocation8 + $0x1a0] sm:$0xff]
    %v706 = vld [vmem:[#allocation8 + $0x1a8] sm:$0xff]
    %v707 = vld [vmem:[#allocation8 + $0x1b0] sm:$0xff]
    %v708 = vld [vmem:[#allocation8 + $0x1b8] sm:$0xff]
    %v709 = vld [vmem:[#allocation8 + $0x1c0] sm:$0xff]
    %v710 = vld [vmem:[#allocation8 + $0x1c8] sm:$0xff]
    %v711 = vld [vmem:[#allocation8 + $0x1d0] sm:$0xff]
    %v712 = vld [vmem:[#allocation8 + $0x1d8] sm:$0xff]
    %v713 = vld [vmem:[#allocation8 + $0x1e0] sm:$0xff]
    %v714 = vld [vmem:[#allocation8 + $0x1e8] sm:$0xff]
    %v715 = vld [vmem:[#allocation8 + $0x1f0] sm:$0xff]
    %v716 = vld [vmem:[#allocation8 + $0x1f8] sm:$0xff]
    %v717 = vld [vmem:[#allocation8 + $0x200] sm:$0xff]
    %v718 = vld [vmem:[#allocation8 + $0x208] sm:$0xff]
    %v719 = vld [vmem:[#allocation8 + $0x210] sm:$0xff]
    %v720 = vld [vmem:[#allocation8 + $0x218] sm:$0xff]
    %v721 = vld [vmem:[#allocation8 + $0x220] sm:$0xff]
    %v722 = vld [vmem:[#allocation8 + $0x228] sm:$0xff]
    %v723 = vld [vmem:[#allocation8 + $0x230] sm:$0xff]
    %v724 = vld [vmem:[#allocation8 + $0x238] sm:$0xff]
    %v725 = vld [vmem:[#allocation8 + $0x240] sm:$0xff]
    %v726 = vld [vmem:[#allocation8 + $0x248] sm:$0xff]
    %v727 = vld [vmem:[#allocation8 + $0x250] sm:$0xff]
    %v728 = vld [vmem:[#allocation8 + $0x258] sm:$0xff]
    %v729 = vld [vmem:[#allocation8 + $0x260] sm:$0xff]
    %v730 = vld [vmem:[#allocation8 + $0x268] sm:$0xff]
    %v731 = vld [vmem:[#allocation8 + $0x270] sm:$0xff]
    %v732 = vld [vmem:[#allocation8 + $0x278] sm:$0xff]
    %v733 = vld [vmem:[#allocation8 + $0x280] sm:$0xff]
    %v734 = vld [vmem:[#allocation8 + $0x288] sm:$0xff]
    %v735 = vld [vmem:[#allocation8 + $0x290] sm:$0xff]
    %v736 = vld [vmem:[#allocation8 + $0x298] sm:$0xff]
    %v737 = vld [vmem:[#allocation8 + $0x2a0] sm:$0xff]
    %v738 = vld [vmem:[#allocation8 + $0x2a8] sm:$0xff]
    %v739 = vld [vmem:[#allocation8 + $0x2b0] sm:$0xff]
    %v740 = vld [vmem:[#allocation8 + $0x2b8] sm:$0xff]
    %v741 = vld [vmem:[#allocation8 + $0x2c0] sm:$0xff]
    %v742 = vld [vmem:[#allocation8 + $0x2c8] sm:$0xff]
    %v743 = vld [vmem:[#allocation8 + $0x2d0] sm:$0xff]
    %v744 = vld [vmem:[#allocation8 + $0x2d8] sm:$0xff]
    %v745 = vld [vmem:[#allocation8 + $0x2e0] sm:$0xff]
    %v746 = vld [vmem:[#allocation8 + $0x2e8] sm:$0xff]
    %v747 = vld [vmem:[#allocation8 + $0x2f0] sm:$0xff]
    %v748 = vld [vmem:[#allocation8 + $0x2f8] sm:$0xff]
    %v749 = vld [vmem:[#allocation8 + $0x300] sm:$0xff]
    %v750 = vld [vmem:[#allocation8 + $0x308] sm:$0xff]
    %v751 = vld [vmem:[#allocation8 + $0x310] sm:$0xff]
    %v752 = vld [vmem:[#allocation8 + $0x318] sm:$0xff]
    %v753 = vld [vmem:[#allocation8 + $0x320] sm:$0xff]
    %v754 = vld [vmem:[#allocation8 + $0x328] sm:$0xff]
    %v755 = vld [vmem:[#allocation8 + $0x330] sm:$0xff]
    %v756 = vld [vmem:[#allocation8 + $0x338] sm:$0xff]
    %v757 = vld [vmem:[#allocation8 + $0x340] sm:$0xff]
    %v758 = vld [vmem:[#allocation8 + $0x348] sm:$0xff]
    %v759 = vld [vmem:[#allocation8 + $0x350] sm:$0xff]
    %v760 = vld [vmem:[#allocation8 + $0x358] sm:$0xff]
    %v761 = vld [vmem:[#allocation8 + $0x360] sm:$0xff]
    %v762 = vld [vmem:[#allocation8 + $0x368] sm:$0xff]
    %v763 = vld [vmem:[#allocation8 + $0x370] sm:$0xff]
    %v764 = vld [vmem:[#allocation8 + $0x378] sm:$0xff]
    %v765 = vld [vmem:[#allocation8 + $0x380] sm:$0xff]
    %v766 = vld [vmem:[#allocation8 + $0x388] sm:$0xff]
    %v767 = vld [vmem:[#allocation8 + $0x390] sm:$0xff]
    %v768 = vld [vmem:[#allocation8 + $0x398] sm:$0xff]
    %v769 = vld [vmem:[#allocation8 + $0x3a0] sm:$0xff]
    %v770 = vld [vmem:[#allocation8 + $0x3a8] sm:$0xff]
    %v771 = vld [vmem:[#allocation8 + $0x3b0] sm:$0xff]
    %v772 = vld [vmem:[#allocation8 + $0x3b8] sm:$0xff]
    %v773 = vld [vmem:[#allocation8 + $0x3c0] sm:$0xff]
    %v774 = vld [vmem:[#allocation8 + $0x3c8] sm:$0xff]
    %v775 = vld [vmem:[#allocation8 + $0x3d0] sm:$0xff]
    %v776 = vld [vmem:[#allocation8 + $0x3d8] sm:$0xff]
    %v777 = vld [vmem:[#allocation8 + $0x3e0] sm:$0xff]
    %v778 = vld [vmem:[#allocation8 + $0x3e8] sm:$0xff]
    %v779 = vld [vmem:[#allocation8 + $0x3f0] sm:$0xff]
    %v780 = vld [vmem:[#allocation8 + $0x3f8] sm:$0xff]
    %v781 = vld [vmem:[#allocation8 + $0x400] sm:$0xff]
    %v782 = vld [vmem:[#allocation8 + $0x408] sm:$0xff]
    %v783 = vld [vmem:[#allocation8 + $0x410] sm:$0xff]
    %v784 = vld [vmem:[#allocation8 + $0x418] sm:$0xff]
    %v785 = vld [vmem:[#allocation8 + $0x420] sm:$0xff]
    %v786 = vld [vmem:[#allocation8 + $0x428] sm:$0xff]
    %v787 = vld [vmem:[#allocation8 + $0x430] sm:$0xff]
    %v788 = vld [vmem:[#allocation8 + $0x438] sm:$0xff]
    %v789 = vld [vmem:[#allocation8 + $0x440] sm:$0xff]
    %v790 = vld [vmem:[#allocation8 + $0x448] sm:$0xff]
    %v791 = vld [vmem:[#allocation8 + $0x450] sm:$0xff]
    %v792 = vld [vmem:[#allocation8 + $0x458] sm:$0xff]
    %v793 = vld [vmem:[#allocation8 + $0x460] sm:$0xff]
    %v794 = vld [vmem:[#allocation8 + $0x468] sm:$0xff]
    %v795 = vld [vmem:[#allocation8 + $0x470] sm:$0xff]
    %v796 = vld [vmem:[#allocation8 + $0x478] sm:$0xff]
    %v797 = vld [vmem:[#allocation8 + $0x480] sm:$0xff]
    %v798 = vld [vmem:[#allocation8 + $0x488] sm:$0xff]
    %v799 = vld [vmem:[#allocation8 + $0x490] sm:$0xff]
    %v800 = vld [vmem:[#allocation8 + $0x498] sm:$0xff]
    %v801 = vld [vmem:[#allocation8 + $0x4a0] sm:$0xff]
    %v802 = vld [vmem:[#allocation8 + $0x4a8] sm:$0xff]
    %v803 = vld [vmem:[#allocation8 + $0x4b0] sm:$0xff]
    %v804 = vld [vmem:[#allocation8 + $0x4b8] sm:$0xff]
    %v805 = vld [vmem:[#allocation8 + $0x4c0] sm:$0xff]
    %v806 = vld [vmem:[#allocation8 + $0x4c8] sm:$0xff]
    %v807 = vld [vmem:[#allocation8 + $0x4d0] sm:$0xff]
    %v808 = vld [vmem:[#allocation8 + $0x4d8] sm:$0xff]
    %v809 = vld [vmem:[#allocation8 + $0x4e0] sm:$0xff]
    %v810 = vld [vmem:[#allocation8 + $0x4e8] sm:$0xff]
    %v811 = vld [vmem:[#allocation8 + $0x4f0] sm:$0xff]
    %v812 = vld [vmem:[#allocation8 + $0x4f8] sm:$0xff]
    %v813 = vld [vmem:[#allocation8 + $0x500] sm:$0xff]
    %v814 = vld [vmem:[#allocation8 + $0x508] sm:$0xff]
    %v815 = vld [vmem:[#allocation8 + $0x510] sm:$0xff]
    %v816 = vld [vmem:[#allocation8 + $0x518] sm:$0xff]
    %v817 = vld [vmem:[#allocation8 + $0x520] sm:$0xff]
    %v818 = vld [vmem:[#allocation8 + $0x528] sm:$0xff]
    %v819 = vld [vmem:[#allocation8 + $0x530] sm:$0xff]
    %v820 = vld [vmem:[#allocation8 + $0x538] sm:$0xff]
    %v821 = vld [vmem:[#allocation8 + $0x540] sm:$0xff]
    %v822 = vld [vmem:[#allocation8 + $0x548] sm:$0xff]
    %v823 = vld [vmem:[#allocation8 + $0x550] sm:$0xff]
    %v824 = vld [vmem:[#allocation8 + $0x558] sm:$0xff]
    %v825 = vld [vmem:[#allocation8 + $0x560] sm:$0xff]
    %v826 = vld [vmem:[#allocation8 + $0x568] sm:$0xff]
    %v827 = vld [vmem:[#allocation8 + $0x570] sm:$0xff]
    %v828 = vld [vmem:[#allocation8 + $0x578] sm:$0xff]
    %v829 = vld [vmem:[#allocation8 + $0x580] sm:$0xff]
    %v830 = vld [vmem:[#allocation8 + $0x588] sm:$0xff]
    %v831 = vld [vmem:[#allocation8 + $0x590] sm:$0xff]
    %v832 = vld [vmem:[#allocation8 + $0x598] sm:$0xff]
    %v833 = vld [vmem:[#allocation8 + $0x5a0] sm:$0xff]
    %v834 = vld [vmem:[#allocation8 + $0x5a8] sm:$0xff]
    %v835 = vld [vmem:[#allocation8 + $0x5b0] sm:$0xff]
    %v836 = vld [vmem:[#allocation8 + $0x5b8] sm:$0xff]
    %v837 = vld [vmem:[#allocation8 + $0x5c0] sm:$0xff]
    %v838 = vld [vmem:[#allocation8 + $0x5c8] sm:$0xff]
    %v839 = vld [vmem:[#allocation8 + $0x5d0] sm:$0xff]
    %v840 = vld [vmem:[#allocation8 + $0x5d8] sm:$0xff]
    %v841 = vld [vmem:[#allocation8 + $0x5e0] sm:$0xff]
    %v842 = vld [vmem:[#allocation8 + $0x5e8] sm:$0xff]
    %v843 = vld [vmem:[#allocation8 + $0x5f0] sm:$0xff]
    %v844 = vld [vmem:[#allocation8 + $0x5f8] sm:$0xff]
    %v845 = vld [vmem:[#allocation8 + $0x600] sm:$0xff]
    %v846 = vld [vmem:[#allocation8 + $0x608] sm:$0xff]
    %v847 = vld [vmem:[#allocation8 + $0x610] sm:$0xff]
    %v848 = vld [vmem:[#allocation8 + $0x618] sm:$0xff]
    %v849 = vld [vmem:[#allocation8 + $0x620] sm:$0xff]
    %v850 = vld [vmem:[#allocation8 + $0x628] sm:$0xff]
    %v851 = vld [vmem:[#allocation8 + $0x630] sm:$0xff]
    %v852 = vld [vmem:[#allocation8 + $0x638] sm:$0xff]
    %v853 = vld [vmem:[#allocation8 + $0x640] sm:$0xff]
    %v854 = vld [vmem:[#allocation8 + $0x648] sm:$0xff]
    %v855 = vld [vmem:[#allocation8 + $0x650] sm:$0xff]
    %v856 = vld [vmem:[#allocation8 + $0x658] sm:$0xff]
    %v857 = vld [vmem:[#allocation8 + $0x660] sm:$0xff]
    %v858 = vld [vmem:[#allocation8 + $0x668] sm:$0xff]
    %v859 = vld [vmem:[#allocation8 + $0x670] sm:$0xff]
    %v860 = vld [vmem:[#allocation8 + $0x678] sm:$0xff]
    %v861 = vld [vmem:[#allocation8 + $0x680] sm:$0xff]
    %v862 = vld [vmem:[#allocation8 + $0x688] sm:$0xff]
    %v863 = vld [vmem:[#allocation8 + $0x690] sm:$0xff]
    %v864 = vld [vmem:[#allocation8 + $0x698] sm:$0xff]
    %v865 = vld [vmem:[#allocation8 + $0x6a0] sm:$0xff]
    %v866 = vld [vmem:[#allocation8 + $0x6a8] sm:$0xff]
    %v867 = vld [vmem:[#allocation8 + $0x6b0] sm:$0xff]
    %v868 = vld [vmem:[#allocation8 + $0x6b8] sm:$0xff]
    %v869 = vld [vmem:[#allocation8 + $0x6c0] sm:$0xff]
    %v870 = vld [vmem:[#allocation8 + $0x6c8] sm:$0xff]
    %v871 = vld [vmem:[#allocation8 + $0x6d0] sm:$0xff]
    %v872 = vld [vmem:[#allocation8 + $0x6d8] sm:$0xff]
    %v873 = vld [vmem:[#allocation8 + $0x6e0] sm:$0xff]
    %v874 = vld [vmem:[#allocation8 + $0x6e8] sm:$0xff]
    %v875 = vld [vmem:[#allocation8 + $0x6f0] sm:$0xff]
    %v876 = vld [vmem:[#allocation8 + $0x6f8] sm:$0xff]
    %v877 = vld [vmem:[#allocation8 + $0x700] sm:$0xff]
    %v878 = vld [vmem:[#allocation8 + $0x708] sm:$0xff]
    %v879 = vld [vmem:[#allocation8 + $0x710] sm:$0xff]
    %v880 = vld [vmem:[#allocation8 + $0x718] sm:$0xff]
    %v881 = vld [vmem:[#allocation8 + $0x720] sm:$0xff]
    %v882 = vld [vmem:[#allocation8 + $0x728] sm:$0xff]
    %v883 = vld [vmem:[#allocation8 + $0x730] sm:$0xff]
    %v884 = vld [vmem:[#allocation8 + $0x738] sm:$0xff]
    %v885 = vld [vmem:[#allocation8 + $0x740] sm:$0xff]
    %v886 = vld [vmem:[#allocation8 + $0x748] sm:$0xff]
    %v887 = vld [vmem:[#allocation8 + $0x750] sm:$0xff]
    %v888 = vld [vmem:[#allocation8 + $0x758] sm:$0xff]
    %v889 = vld [vmem:[#allocation8 + $0x760] sm:$0xff]
    %v890 = vld [vmem:[#allocation8 + $0x768] sm:$0xff]
    %v891 = vld [vmem:[#allocation8 + $0x770] sm:$0xff]
    %v892 = vld [vmem:[#allocation8 + $0x778] sm:$0xff]
    %v893 = vld [vmem:[#allocation8 + $0x780] sm:$0xff]
    %v894 = vld [vmem:[#allocation8 + $0x788] sm:$0xff]
    %v895 = vld [vmem:[#allocation8 + $0x790] sm:$0xff]
    %v896 = vld [vmem:[#allocation8 + $0x798] sm:$0xff]
    %v897 = vld [vmem:[#allocation8 + $0x7a0] sm:$0xff]
    %v898 = vld [vmem:[#allocation8 + $0x7a8] sm:$0xff]
    %v899 = vld [vmem:[#allocation8 + $0x7b0] sm:$0xff]
    %v900 = vld [vmem:[#allocation8 + $0x7b8] sm:$0xff]
    %v901 = vld [vmem:[#allocation8 + $0x7c0] sm:$0xff]
    %v902 = vld [vmem:[#allocation8 + $0x7c8] sm:$0xff]
    %v903 = vld [vmem:[#allocation8 + $0x7d0] sm:$0xff]
    %v904 = vld [vmem:[#allocation8 + $0x7d8] sm:$0xff]
    %v905 = vld [vmem:[#allocation8 + $0x7e0] sm:$0xff]
    %v906 = vld [vmem:[#allocation8 + $0x7e8] sm:$0xff]
    %v907 = vld [vmem:[#allocation8 + $0x7f0] sm:$0xff]
    %v908 = vld [vmem:[#allocation8 + $0x7f8] sm:$0xff]
    %v909 = vld [vmem:[#allocation10] sm:$0xf]
    %v911 = vlaneseq
    %v912 = vshrl.u32 %v911, 7
    %v913 = vsub.s32 0, %v912
    %v914 = vrot.slane %v909, %v913
    %v915 = vlaneseq
    %v916 = vshrl.u32 %v915, 7
    %v917 = vsub.s32 1, %v916
    %v918 = vrot.slane %v909, %v917
    %v919 = vlaneseq
    %v920 = vshrl.u32 %v919, 7
    %v921 = vsub.s32 2, %v920
    %v922 = vrot.slane %v909, %v921
    %v923 = vlaneseq
    %v924 = vshrl.u32 %v923, 7
    %v925 = vsub.s32 3, %v924
    %v926 = vrot.slane %v909, %v925
    %931 = vmatprep.subr.mxu0 %v654
    %932 = vmatpush1.msra.mxu0 %v653
    %933 = vmatprep.subr.mxu0 %v658
    %934 = vmatpush1.msra.mxu0 %v657
    %935 = vmatprep.subr.mxu0 %v662
    %936 = vmatpush1.msra.mxu0 %v661
    %937 = vmatprep.subr.mxu0 %v666
    %938 = vmatpush1.msra.mxu0 %v665
    %939 = vmatprep.subr.mxu0 %v670
    %940 = vmatpush1.msra.mxu0 %v669
    %941 = vmatprep.subr.mxu0 %v674
    %942 = vmatpush1.msra.mxu0 %v673
    %943 = vmatprep.subr.mxu0 %v678
    %944 = vmatpush1.msra.mxu0 %v677
    %945 = vmatprep.subr.mxu0 %v682
    %946 = vmatpush1.msra.mxu0 %v681
    %947 = vmatprep.subr.mxu0 %v686
    %948 = vmatpush1.msra.mxu0 %v685
    %949 = vmatprep.subr.mxu0 %v690
    %950 = vmatpush1.msra.mxu0 %v689
    %951 = vmatprep.subr.mxu0 %v694
    %952 = vmatpush1.msra.mxu0 %v693
    %953 = vmatprep.subr.mxu0 %v698
    %954 = vmatpush1.msra.mxu0 %v697
    %955 = vmatprep.subr.mxu0 %v702
    %956 = vmatpush1.msra.mxu0 %v701
    %957 = vmatprep.subr.mxu0 %v706
    %958 = vmatpush1.msra.mxu0 %v705
    %959 = vmatprep.subr.mxu0 %v710
    %960 = vmatpush1.msra.mxu0 %v709
    %961 = vmatprep.subr.mxu0 %v714
    %962 = vmatpush1.msra.mxu0 %v713
    %963 = vmatprep.subr.mxu0 %v718
    %964 = vmatpush1.msra.mxu0 %v717
    %965 = vmatprep.subr.mxu0 %v722
    %966 = vmatpush1.msra.mxu0 %v721
    %967 = vmatprep.subr.mxu0 %v726
    %968 = vmatpush1.msra.mxu0 %v725
    %969 = vmatprep.subr.mxu0 %v730
    %970 = vmatpush1.msra.mxu0 %v729
    %971 = vmatprep.subr.mxu0 %v734
    %972 = vmatpush1.msra.mxu0 %v733
    %973 = vmatprep.subr.mxu0 %v738
    %974 = vmatpush1.msra.mxu0 %v737
    %975 = vmatprep.subr.mxu0 %v742
    %976 = vmatpush1.msra.mxu0 %v741
    %977 = vmatprep.subr.mxu0 %v746
    %978 = vmatpush1.msra.mxu0 %v745
    %979 = vmatprep.subr.mxu0 %v750
    %980 = vmatpush1.msra.mxu0 %v749
    %981 = vmatprep.subr.mxu0 %v754
    %982 = vmatpush1.msra.mxu0 %v753
    %983 = vmatprep.subr.mxu0 %v758
    %984 = vmatpush1.msra.mxu0 %v757
    %985 = vmatprep.subr.mxu0 %v762
    %986 = vmatpush1.msra.mxu0 %v761
    %987 = vmatprep.subr.mxu0 %v766
    %988 = vmatpush1.msra.mxu0 %v765
    %989 = vmatprep.subr.mxu0 %v770
    %990 = vmatpush1.msra.mxu0 %v769
    %991 = vmatprep.subr.mxu0 %v774
    %992 = vmatpush1.msra.mxu0 %v773
    %993 = vmatprep.subr.mxu0 %v778
    %994 = vmatpush1.msra.mxu0 %v777
    %995 = vmatprep.mubr.f32.mxu0 %v650
    %996 = vmatmul.mubr.f32.gmra.mrb[0].mxu0 %v649
    %v997 = vpop.f32.mrb[0].mxu0
    %v998 = vadd.f32 %v914, %v997
    %v999 = vpop.f32.mrb[0].mxu0
    %v1000 = vadd.f32 %v918, %v999
    %1001 = vdwg.mxu0
    %1002 = vmatprep.subr.mxu0 %v782
    %1003 = vmatpush1.msra.mxu0 %v781
    %1004 = vmatprep.subr.mxu0 %v786
    %1005 = vmatpush1.msra.mxu0 %v785
    %1006 = vmatprep.subr.mxu0 %v790
    %1007 = vmatpush1.msra.mxu0 %v789
    %1008 = vmatprep.subr.mxu0 %v794
    %1009 = vmatpush1.msra.mxu0 %v793
    %1010 = vmatprep.subr.mxu0 %v798
    %1011 = vmatpush1.msra.mxu0 %v797
    %1012 = vmatprep.subr.mxu0 %v802
    %1013 = vmatpush1.msra.mxu0 %v801
    %1014 = vmatprep.subr.mxu0 %v806
    %1015 = vmatpush1.msra.mxu0 %v805
    %1016 = vmatprep.subr.mxu0 %v810
    %1017 = vmatpush1.msra.mxu0 %v809
    %1018 = vmatprep.subr.mxu0 %v814
    %1019 = vmatpush1.msra.mxu0 %v813
    %1020 = vmatprep.subr.mxu0 %v818
    %1021 = vmatpush1.msra.mxu0 %v817
    %1022 = vmatprep.subr.mxu0 %v822
    %1023 = vmatpush1.msra.mxu0 %v821
    %1024 = vmatprep.subr.mxu0 %v826
    %1025 = vmatpush1.msra.mxu0 %v825
    %1026 = vmatprep.subr.mxu0 %v830
    %1027 = vmatpush1.msra.mxu0 %v829
    %1028 = vmatprep.subr.mxu0 %v834
    %1029 = vmatpush1.msra.mxu0 %v833
    %1030 = vmatprep.subr.mxu0 %v838
    %1031 = vmatpush1.msra.mxu0 %v837
    %1032 = vmatprep.subr.mxu0 %v842
    %1033 = vmatpush1.msra.mxu0 %v841
    %1034 = vmatprep.subr.mxu0 %v846
    %1035 = vmatpush1.msra.mxu0 %v845
    %1036 = vmatprep.subr.mxu0 %v850
    %1037 = vmatpush1.msra.mxu0 %v849
    %1038 = vmatprep.subr.mxu0 %v854
    %1039 = vmatpush1.msra.mxu0 %v853
    %1040 = vmatprep.subr.mxu0 %v858
    %1041 = vmatpush1.msra.mxu0 %v857
    %1042 = vmatprep.subr.mxu0 %v862
    %1043 = vmatpush1.msra.mxu0 %v861
    %1044 = vmatprep.subr.mxu0 %v866
    %1045 = vmatpush1.msra.mxu0 %v865
    %1046 = vmatprep.subr.mxu0 %v870
    %1047 = vmatpush1.msra.mxu0 %v869
    %1048 = vmatprep.subr.mxu0 %v874
    %1049 = vmatpush1.msra.mxu0 %v873
    %1050 = vmatprep.subr.mxu0 %v878
    %1051 = vmatpush1.msra.mxu0 %v877
    %1052 = vmatprep.subr.mxu0 %v882
    %1053 = vmatpush1.msra.mxu0 %v881
    %1054 = vmatprep.subr.mxu0 %v886
    %1055 = vmatpush1.msra.mxu0 %v885
    %1056 = vmatprep.subr.mxu0 %v890
    %1057 = vmatpush1.msra.mxu0 %v889
    %1058 = vmatprep.subr.mxu0 %v894
    %1059 = vmatpush1.msra.mxu0 %v893
    %1060 = vmatprep.subr.mxu0 %v898
    %1061 = vmatpush1.msra.mxu0 %v897
    %1062 = vmatprep.subr.mxu0 %v902
    %1063 = vmatpush1.msra.mxu0 %v901
    %1064 = vmatprep.subr.mxu0 %v906
    %1065 = vmatpush1.msra.mxu0 %v905
    %1066 = vmatprep.mubr.f32.mxu0 %v652
    %1067 = vmatmul.mubr.f32.gmra.mrb[0].mxu0 %v651
    %v1068 = vpop.f32.mrb[0].mxu0
    %v1069 = vadd.f32 %v998, %v1068
    %v1070 = vpop.f32.mrb[0].mxu0
    %v1071 = vadd.f32 %v1000, %v1070
    %1072 = vdwg.mxu0
    %1073 = vmatprep.subr.mxu0 %v656
    %1074 = vmatpush1.msra.mxu0 %v655
    %1075 = vmatprep.subr.mxu0 %v660
    %1076 = vmatpush1.msra.mxu0 %v659
    %1077 = vmatprep.subr.mxu0 %v664
    %1078 = vmatpush1.msra.mxu0 %v663
    %1079 = vmatprep.subr.mxu0 %v668
    %1080 = vmatpush1.msra.mxu0 %v667
    %1081 = vmatprep.subr.mxu0 %v672
    %1082 = vmatpush1.msra.mxu0 %v671
    %1083 = vmatprep.subr.mxu0 %v676
    %1084 = vmatpush1.msra.mxu0 %v675
    %1085 = vmatprep.subr.mxu0 %v680
    %1086 = vmatpush1.msra.mxu0 %v679
    %1087 = vmatprep.subr.mxu0 %v684
    %1088 = vmatpush1.msra.mxu0 %v683
    %1089 = vmatprep.subr.mxu0 %v688
    %1090 = vmatpush1.msra.mxu0 %v687
    %1091 = vmatprep.subr.mxu0 %v692
    %1092 = vmatpush1.msra.mxu0 %v691
    %1093 = vmatprep.subr.mxu0 %v696
    %1094 = vmatpush1.msra.mxu0 %v695
    %1095 = vmatprep.subr.mxu0 %v700
    %1096 = vmatpush1.msra.mxu0 %v699
    %1097 = vmatprep.subr.mxu0 %v704
    %1098 = vmatpush1.msra.mxu0 %v703
    %1099 = vmatprep.subr.mxu0 %v708
    %1100 = vmatpush1.msra.mxu0 %v707
    %1101 = vmatprep.subr.mxu0 %v712
    %1102 = vmatpush1.msra.mxu0 %v711
    %1103 = vmatprep.subr.mxu0 %v716
    %1104 = vmatpush1.msra.mxu0 %v715
    %1105 = vmatprep.subr.mxu0 %v720
    %1106 = vmatpush1.msra.mxu0 %v719
    %1107 = vmatprep.subr.mxu0 %v724
    %1108 = vmatpush1.msra.mxu0 %v723
    %1109 = vmatprep.subr.mxu0 %v728
    %1110 = vmatpush1.msra.mxu0 %v727
    %1111 = vmatprep.subr.mxu0 %v732
    %1112 = vmatpush1.msra.mxu0 %v731
    %1113 = vmatprep.subr.mxu0 %v736
    %1114 = vmatpush1.msra.mxu0 %v735
    %1115 = vmatprep.subr.mxu0 %v740
    %1116 = vmatpush1.msra.mxu0 %v739
    %1117 = vmatprep.subr.mxu0 %v744
    %1118 = vmatpush1.msra.mxu0 %v743
    %1119 = vmatprep.subr.mxu0 %v748
    %1120 = vmatpush1.msra.mxu0 %v747
    %1121 = vmatprep.subr.mxu0 %v752
    %1122 = vmatpush1.msra.mxu0 %v751
    %1123 = vmatprep.subr.mxu0 %v756
    %1124 = vmatpush1.msra.mxu0 %v755
    %1125 = vmatprep.subr.mxu0 %v760
    %1126 = vmatpush1.msra.mxu0 %v759
    %1127 = vmatprep.subr.mxu0 %v764
    %1128 = vmatpush1.msra.mxu0 %v763
    %1129 = vmatprep.subr.mxu0 %v768
    %1130 = vmatpush1.msra.mxu0 %v767
    %1131 = vmatprep.subr.mxu0 %v772
    %1132 = vmatpush1.msra.mxu0 %v771
    %1133 = vmatprep.subr.mxu0 %v776
    %1134 = vmatpush1.msra.mxu0 %v775
    %1135 = vmatprep.subr.mxu0 %v780
    %1136 = vmatpush1.msra.mxu0 %v779
    %1137 = vmatprep.mubr.f32.mxu0 %v650
    %1138 = vmatmul.mubr.f32.gmra.mrb[0].mxu0 %v649
    %v1139 = vpop.f32.mrb[0].mxu0
    %v1140 = vadd.f32 %v922, %v1139
    %v1141 = vpop.f32.mrb[0].mxu0
    %v1142 = vadd.f32 %v926, %v1141
    %1143 = vdwg.mxu0
    %1144 = vmatprep.subr.mxu0 %v784
    %1145 = vmatpush1.msra.mxu0 %v783
    %1146 = vmatprep.subr.mxu0 %v788
    %1147 = vmatpush1.msra.mxu0 %v787
    %1148 = vmatprep.subr.mxu0 %v792
    %1149 = vmatpush1.msra.mxu0 %v791
    %1150 = vmatprep.subr.mxu0 %v796
    %1151 = vmatpush1.msra.mxu0 %v795
    %1152 = vmatprep.subr.mxu0 %v800
    %1153 = vmatpush1.msra.mxu0 %v799
    %1154 = vmatprep.subr.mxu0 %v804
    %1155 = vmatpush1.msra.mxu0 %v803
    %1156 = vmatprep.subr.mxu0 %v808
    %1157 = vmatpush1.msra.mxu0 %v807
    %1158 = vmatprep.subr.mxu0 %v812
    %1159 = vmatpush1.msra.mxu0 %v811
    %1160 = vmatprep.subr.mxu0 %v816
    %1161 = vmatpush1.msra.mxu0 %v815
    %1162 = vmatprep.subr.mxu0 %v820
    %1163 = vmatpush1.msra.mxu0 %v819
    %1164 = vmatprep.subr.mxu0 %v824
    %1165 = vmatpush1.msra.mxu0 %v823
    %1166 = vmatprep.subr.mxu0 %v828
    %1167 = vmatpush1.msra.mxu0 %v827
    %1168 = vmatprep.subr.mxu0 %v832
    %1169 = vmatpush1.msra.mxu0 %v831
    %1170 = vmatprep.subr.mxu0 %v836
    %1171 = vmatpush1.msra.mxu0 %v835
    %1172 = vmatprep.subr.mxu0 %v840
    %1173 = vmatpush1.msra.mxu0 %v839
    %1174 = vmatprep.subr.mxu0 %v844
    %1175 = vmatpush1.msra.mxu0 %v843
    %1176 = vmatprep.subr.mxu0 %v848
    %1177 = vmatpush1.msra.mxu0 %v847
    %1178 = vmatprep.subr.mxu0 %v852
    %1179 = vmatpush1.msra.mxu0 %v851
    %1180 = vmatprep.subr.mxu0 %v856
    %1181 = vmatpush1.msra.mxu0 %v855
    %1182 = vmatprep.subr.mxu0 %v860
    %1183 = vmatpush1.msra.mxu0 %v859
    %1184 = vmatprep.subr.mxu0 %v864
    %1185 = vmatpush1.msra.mxu0 %v863
    %1186 = vmatprep.subr.mxu0 %v868
    %1187 = vmatpush1.msra.mxu0 %v867
    %1188 = vmatprep.subr.mxu0 %v872
    %1189 = vmatpush1.msra.mxu0 %v871
    %1190 = vmatprep.subr.mxu0 %v876
    %1191 = vmatpush1.msra.mxu0 %v875
    %1192 = vmatprep.subr.mxu0 %v880
    %1193 = vmatpush1.msra.mxu0 %v879
    %1194 = vmatprep.subr.mxu0 %v884
    %1195 = vmatpush1.msra.mxu0 %v883
    %1196 = vmatprep.subr.mxu0 %v888
    %1197 = vmatpush1.msra.mxu0 %v887
    %1198 = vmatprep.subr.mxu0 %v892
    %1199 = vmatpush1.msra.mxu0 %v891
    %1200 = vmatprep.subr.mxu0 %v896
    %1201 = vmatpush1.msra.mxu0 %v895
    %1202 = vmatprep.subr.mxu0 %v900
    %1203 = vmatpush1.msra.mxu0 %v899
    %1204 = vmatprep.subr.mxu0 %v904
    %1205 = vmatpush1.msra.mxu0 %v903
    %1206 = vmatprep.subr.mxu0 %v908
    %1207 = vmatpush1.msra.mxu0 %v907
    %1208 = vmatprep.mubr.f32.mxu0 %v652
    %1209 = vmatmul.mubr.f32.gmra.mrb[0].mxu0 %v651
    %v1210 = vpop.f32.mrb[0].mxu0
    %v1211 = vadd.f32 %v1140, %v1210
    %v1212 = vpop.f32.mrb[0].mxu0
    %v1213 = vadd.f32 %v1142, %v1212
    %1214 = vdwg.mxu0
    %v1215 = vmax.f32 %v1069, 0.0
    %v1216 = vmax.f32 %v1071, 0.0
    %v1217 = vmax.f32 %v1211, 0.0
    %v1218 = vmax.f32 %v1213, 0.0
    %1219 = vst [vmem:[#allocation11] sm:$0xff] %v1215
    %1220 = vst [vmem:[#allocation11 + $0x8] sm:$0xff] %v1216
    %1221 = vst [vmem:[#allocation11 + $0x10] sm:$0xff] %v1217
    %1222 = vst [vmem:[#allocation11 + $0x18] sm:$0xff] %v1218
    // Predicated region
    $region42: #{_lambda_.2} parent=1 // pred_check
      _
    $region43: #{_lambda_.2} parent=1 // pred_check_branch
      %1224 = sbr.rel (0) target = $region45
    $region44: #{_lambda_.2} parent=1 // pred_region
      %s1226 = ssub.s32 512, 512
      %1227 = vsyncadd [#allocation4], %s1226
      %s1229 = sshll.u32 [#allocation11], 4
      %s1230 = int_to_ptr.vmem [resolvable:$true] %s1229
      %1232 = dma.vmem_to_hbm [thread:$0]  %s1230, 512, %s5, [#allocation4]
    $region45: #{_lambda_.2} parent=1 // pred_fallthru
      _
    // Predicated region
    $region46: #{_lambda_.2} parent=1 // pred_check
      _
    $region47: #{_lambda_.2} parent=1 // pred_check_branch
      %1234 = sbr.rel (0) target = $region49
    $region48: #{_lambda_.2} parent=1 // pred_region
      %1235 = dma.done [#allocation4], 512
    $region49: #{_lambda_.2} parent=1 // pred_fallthru
      _
    %1236 = vsyncpa [#allocation3], 1
    %1237 = vsyncpa [#allocation6], 1
    %1238 = vsyncpa [#allocation9], 1
    %1239 = vsyncpa [#allocation4], 1

</llo_original>
